<compile_context>
chip_gen: v7x
topology: tpu7x:2x2x1
jax: 0.10.0
libtpu: 0.0.40
codegen_flags: <defaults>
</compile_context>

<pallas_src>
import jax
import jax.numpy as jnp
from jax.experimental import pallas as pl
from jax.experimental.pallas import tpu as pltpu


# ----------------------------------------------------------------------------
# Fused BasicBlock kernel (one grid step per B_TILE images).
# ----------------------------------------------------------------------------
def _make_block_kernel(B, H, W, Cin, Cout, Ho, Wo, alpha1, alpha2, abit,
                       has_sc_conv):
    WC = W * Cin
    WOC = Wo * Cout
    K2 = 3 * WOC + (WC if has_sc_conv else 0)
    n_lv = float(2.0 ** abit - 1.0)
    a1 = float(alpha1)
    a2 = float(alpha2)

    def pact(y, alpha):
        # PactReLU: clip to [0, alpha], uniform a_bit quantization (f32).
        y = jnp.clip(y, 0.0, alpha)
        return jnp.round(y * (n_lv / alpha)) * (alpha / n_lv)

    def kernel(x_ref, w1_ref, b1_ref, w2_ref, b2_ref, o_ref, op1, op2):
        x = x_ref[...]                                   # (B, H, W*Cin) f32

        # ---- assemble conv1 operand: [x(ho-1) | x(ho) | x(ho+1)] on lanes.
        # Only the two border row-slabs are zeroed; the interior is fully
        # overwritten every step (megacore-safe, minimal store-slot work).
        op1[:, 0:1, 0:WC] = jnp.zeros((B, 1, WC), jnp.float32)
        op1[:, 1:Ho, 0:WC] = x[:, 0:H - 1, :]
        op1[:, :, WC:2 * WC] = x
        op1[:, 0:Ho - 1, 2 * WC:3 * WC] = x[:, 1:H, :]
        op1[:, Ho - 1:Ho, 2 * WC:3 * WC] = jnp.zeros((B, 1, WC), jnp.float32)

        # ---- conv1 (ONE bf16 MXU matmul, M=B*Ho, K=3*W*Cin) + BN1 + PACT ----
        lhs1 = op1[...].reshape(B * Ho, 3 * WC).astype(jnp.bfloat16)
        acc1 = jnp.dot(lhs1, w1_ref[...], preferred_element_type=jnp.float32)
        y1 = pact(acc1 + b1_ref[...], a1)                # (B*Ho, WOC) f32
        y1 = y1.reshape(B, Ho, WOC)

        # ---- assemble conv2 operand: [y1(ho-1) | y1(ho) | y1(ho+1) | x]
        # (the trailing x block realizes the 1x1 shortcut conv in the same dot)
        op2[:, 0:1, 0:WOC] = jnp.zeros((B, 1, WOC), jnp.float32)
        op2[:, 1:Ho, 0:WOC] = y1[:, 0:Ho - 1, :]
        op2[:, :, WOC:2 * WOC] = y1
        op2[:, 0:Ho - 1, 2 * WOC:3 * WOC] = y1[:, 1:Ho, :]
        op2[:, Ho - 1:Ho, 2 * WOC:3 * WOC] = jnp.zeros((B, 1, WOC), jnp.float32)
        if has_sc_conv:
            op2[:, :, 3 * WOC:3 * WOC + WC] = x

        # ---- conv2 (+ folded shortcut) + BN2 + skip + final PACT ------------
        lhs2 = op2[...].reshape(B * Ho, K2).astype(jnp.bfloat16)
        acc2 = jnp.dot(lhs2, w2_ref[...], preferred_element_type=jnp.float32)
        out = acc2 + b2_ref[...]
        if not has_sc_conv:
            # Identity shortcut (stride == 1 and Cin == Cout), kept exact f32.
            out = out + x.reshape(B * Ho, WC)
        out = pact(out, a2)

        o_ref[...] = out.reshape(B, Ho, WOC)             # full-lane store

    return kernel, K2


def basic_block_pallas(x_nchw, prep, *, abit, stride, in_channels, out_channels,
                       batch_tile=8):
    """Fused BasicBlock forward; input/output in PyTorch NCHW layout."""
    if stride != 1:
        # TODO(synk): stride != 1 needs strided output-row selection.
        raise NotImplementedError("fused BasicBlock kernel implements stride=1")

    N, Cin, H, W = x_nchw.shape
    Cout = out_channels
    Ho, Wo = H, W
    has_sc_conv = (stride != 1) or (in_channels != out_channels)
    WC, WOC = W * Cin, Wo * Cout

    B = max(1, min(batch_tile, N))
    # NCHW -> NHWC, then a free reshape to the lane-dense (N, H, W*Cin) slab.
    x = jnp.transpose(x_nchw, (0, 2, 3, 1)).astype(jnp.float32)
    x = x.reshape(N, H, WC)
    pad_n = (-N) % B
    if pad_n:
        x = jnp.concatenate([x, jnp.zeros((pad_n, H, WC), jnp.float32)], axis=0)
    Np = N + pad_n

    kernel, K2 = _make_block_kernel(B, H, W, Cin, Cout, Ho, Wo,
                                    prep["alpha1"], prep["alpha2"], abit,
                                    has_sc_conv)

    in_specs = [
        pl.BlockSpec((B, H, WC), lambda n: (n, 0, 0)),
        pl.BlockSpec((3 * WC, WOC), lambda n: (0, 0)),
        pl.BlockSpec((1, WOC), lambda n: (0, 0)),
        pl.BlockSpec((K2, WOC), lambda n: (0, 0)),
        pl.BlockSpec((1, WOC), lambda n: (0, 0)),
    ]
    args = [x, prep["w1"], prep["b1"], prep["w2"], prep["b2"]]

    out_flat = pl.pallas_call(
        kernel,
        out_shape=jax.ShapeDtypeStruct((Np, Ho, WOC), jnp.float32),
        grid=(Np // B,),
        in_specs=in_specs,
        out_specs=pl.BlockSpec((B, Ho, WOC), lambda n: (n, 0, 0)),
        scratch_shapes=[pltpu.VMEM((B, Ho, 3 * WC), jnp.float32),
                        pltpu.VMEM((B, Ho, K2), jnp.float32)],
        compiler_params=pltpu.CompilerParams(
            dimension_semantics=("parallel",)),
    )(*args)

    out = out_flat[:N].reshape(N, Ho, Wo, Cout)          # free reshape
    return jnp.transpose(out, (0, 3, 1, 2))              # -> NCHW


# ----------------------------------------------------------------------------
# Parameter preparation (plain JAX "glue", run once):
#   DoReFa weight quantization, BN folding, BN-scale -> weight folding,
#   structured (3*W*Cin, Wo*Cout) weights, shortcut folded under conv2.
# ----------------------------------------------------------------------------
def dorefa_quantize_weight(w, wbit):
    if wbit >= 32:
        return w
    if wbit == 1:
        return jnp.sign(w) * jnp.mean(jnp.abs(w))
    t = jnp.tanh(w)
    t = t / (2.0 * jnp.max(jnp.abs(t))) + 0.5
    n = 2.0 ** wbit - 1.0
    return 2.0 * (jnp.round(t * n) / n) - 1.0


def fold_bn(gamma, beta, mean, var, eps=1e-5):
    scale = gamma / jnp.sqrt(var + eps)
    bias = beta - mean * scale
    return scale, bias


def _big_conv_weights(w_hwio, *, W_in, pad, stride):
    """For each kernel row kh, build a (W_in*Cin, Wo*Cout) matrix B with
    B[p*Cin+ci, wo*Cout+co] = w[kh, p - stride*wo + pad, ci, co] (0 outside the
    kw range), so that  out_row(ho) += x_row(ho+kh-pad) @ B  computes the conv
    for all wo at once (width zero-padding is implicit)."""
    KH, KW, Cin, Cout = w_hwio.shape
    Wo = (W_in + 2 * pad - KW) // stride + 1
    wo_idx = jnp.arange(Wo)
    planes = []
    for kh in range(KH):
        big = jnp.zeros((W_in, Cin, Wo, Cout), jnp.float32)
        for kw in range(KW):
            p = wo_idx * stride + kw - pad                       # source column
            valid = ((p >= 0) & (p < W_in)).astype(jnp.float32)  # (Wo,)
            onehot = jax.nn.one_hot(jnp.clip(p, 0, W_in - 1), W_in,
                                    dtype=jnp.float32)           # (Wo, W_in)
            place = (onehot * valid[:, None]).T                  # (W_in, Wo)
            big = big + place[:, None, :, None] * w_hwio[kh, kw][None, :, None, :]
        planes.append(big.reshape(W_in * Cin, Wo * Cout))
    return jnp.stack(planes, axis=0)                             # (KH, ., .)


def prepare_block_params(params, *, H, W, in_channels, out_channels, stride):
    del H
    Cout = out_channels
    Wo = (W + 2 * 1 - 3) // stride + 1
    WC = W * in_channels
    WOC = Wo * Cout
    has_sc_conv = (stride != 1) or (in_channels != out_channels)

    s1, b1 = params["bn1"]
    s2, b2 = params["bn2"]

    w1 = params["w1"] * s1[None, None, None, :]           # fold BN1 scale
    w2 = params["w2"] * s2[None, None, None, :]           # fold BN2 scale

    w1_k = _big_conv_weights(w1, W_in=W, pad=1, stride=stride).reshape(3 * WC, WOC)
    w2_k = _big_conv_weights(w2, W_in=Wo, pad=1, stride=1).reshape(3 * WOC, WOC)
    b2_total = b2
    if has_sc_conv:
        ssc, bsc = params["bn_sc"]
        wsc = params["w_sc"] * ssc[None, None, None, :]
        wsc_big = _big_conv_weights(wsc, W_in=W, pad=0, stride=stride)[0]
        w2_k = jnp.concatenate([w2_k, wsc_big], axis=0)    # (3*WOC + WC, WOC)
        b2_total = b2 + bsc

    return {
        "w1": w1_k.astype(jnp.bfloat16),
        "b1": jnp.tile(b1, Wo).reshape(1, WOC).astype(jnp.float32),
        "w2": w2_k.astype(jnp.bfloat16),
        "b2": jnp.tile(b2_total, Wo).reshape(1, WOC).astype(jnp.float32),
        "alpha1": params["alpha1"],
        "alpha2": params["alpha2"],
    }


def init_basic_block_params(key, in_channels, out_channels, wbit):
    ks = jax.random.split(key, 16)
    exp = 1  # BasicBlock.expansion

    def conv_w(k, cout, cin, kh, kw):
        # PyTorch layout (Cout, Cin, KH, KW) -> DoReFa quantize -> HWIO
        w = jax.random.normal(k, (cout, cin, kh, kw), jnp.float32) * 0.1
        wq = dorefa_quantize_weight(w, wbit)
        return jnp.transpose(wq, (2, 3, 1, 0))

    def bn_params(k, c):
        k1, k2, k3, k4 = jax.random.split(k, 4)
        gamma = jax.random.uniform(k1, (c,), jnp.float32, 0.5, 1.5)
        beta = jax.random.uniform(k2, (c,), jnp.float32, -0.1, 0.1)
        mean = jax.random.uniform(k3, (c,), jnp.float32, -0.1, 0.1)
        var = jax.random.uniform(k4, (c,), jnp.float32, 0.5, 1.5)
        return fold_bn(gamma, beta, mean, var)

    return {
        "w1": conv_w(ks[0], out_channels, in_channels, 3, 3),
        "bn1": bn_params(ks[1], out_channels),
        "w2": conv_w(ks[2], out_channels * exp, out_channels, 3, 3),
        "bn2": bn_params(ks[3], out_channels * exp),
        "w_sc": conv_w(ks[4], out_channels * exp, in_channels, 1, 1),
        "bn_sc": bn_params(ks[5], out_channels * exp),
        "alpha1": 10.0,   # PACT clipping params (nn.Parameter init in PactReLU)
        "alpha2": 10.0,
    }


# ----------------------------------------------------------------------------
# References for verification.
#   matmul_dtype=float32  -> faithful f32 module semantics.
#   matmul_dtype=bfloat16 -> mirrors the kernel's numerics (bf16 conv operands,
#                            f32 accumulation and f32 bias/PACT epilogue).
# ----------------------------------------------------------------------------
def _ref_conv(x, w, stride, padding):
    return jax.lax.conv_general_dilated(
        x, w, window_strides=(stride, stride),
        padding=[(padding, padding), (padding, padding)],
        dimension_numbers=("NHWC", "HWIO", "NHWC"),
        preferred_element_type=jnp.float32,
        precision=jax.lax.Precision.HIGHEST)


def _ref_pact(x, alpha, abit):
    n = 2.0 ** abit - 1.0
    x = jnp.clip(x, 0.0, alpha)
    return jnp.round(x * (n / alpha)) * (alpha / n)


def basic_block_reference(x_nchw, params, *, abit, stride, in_channels,
                          out_channels, matmul_dtype=jnp.float32):
    x = jnp.transpose(x_nchw, (0, 2, 3, 1)).astype(jnp.float32)
    s1, b1 = params["bn1"]
    s2, b2 = params["bn2"]
    w1 = (params["w1"] * s1[None, None, None, :]).astype(matmul_dtype)
    w2 = (params["w2"] * s2[None, None, None, :]).astype(matmul_dtype)
    xc = x.astype(matmul_dtype)
    y1 = _ref_conv(xc, w1, stride, 1) + b1
    y1 = _ref_pact(y1, params["alpha1"], abit)
    if stride != 1 or in_channels != out_channels:
        ssc, bsc = params["bn_sc"]
        wsc = (params["w_sc"] * ssc[None, None, None, :]).astype(matmul_dtype)
        sc = _ref_conv(xc, wsc, stride, 0) + bsc
    else:
        sc = x                                           # identity skip in f32
    y2 = _ref_conv(y1.astype(matmul_dtype), w2, 1, 1) + b2
    out = _ref_pact(y2 + sc, params["alpha2"], abit)
    return jnp.transpose(out, (0, 3, 1, 2))


# ----------------------------------------------------------------------------
if __name__ == "__main__":
    # BasicBlock(wbit=4, abit=4, qt='d+p', in_channels=4, out_channels=8, stride=1)
    wbit, abit = 4, 4
    N, Cin, H, W = 16, 4, 16, 16
    Cout, stride = 8, 1
    B_TILE = 8        # -> M = 128 MXU rows per dot, grid of 2 "parallel" steps

    key = jax.random.PRNGKey(0)
    kx, kp = jax.random.split(key)
    x = jax.random.normal(kx, (N, Cin, H, W), jnp.float32)   # PyTorch NCHW input
    params = init_basic_block_params(kp, Cin, Cout, wbit)
    prep = prepare_block_params(params, H=H, W=W, in_channels=Cin,
                                out_channels=Cout, stride=stride)

    out = basic_block_pallas(x, prep, abit=abit, stride=stride,
                             in_channels=Cin, out_channels=Cout,
                             batch_tile=B_TILE)
    out = jax.block_until_ready(out)
    assert out.shape == (N, Cout, H // stride, W // stride), out.shape

    step = float(params["alpha2"]) / (2.0 ** abit - 1.0)     # PACT quant step

    # (1) Numerics-matched reference (bf16 MXU operands, f32 accumulation and
    #     epilogue): only rare summation-order PACT flips are allowed.
    ref_bf16 = basic_block_reference(x, params, abit=abit, stride=stride,
                                     in_channels=Cin, out_channels=Cout,
                                     matmul_dtype=jnp.bfloat16)
    d = jnp.abs(out - ref_bf16)
    frac_bad = float(jnp.mean((d > 1e-3).astype(jnp.float32)))
    assert frac_bad < 2e-2, frac_bad

    # (2) Faithful f32 module reference: bf16 MXU operands legitimately flip a
    #     small fraction of PACT quantization decisions (one step each), so
    #     only loose sanity bounds are asserted here.
    ref_f32 = basic_block_reference(x, params, abit=abit, stride=stride,
                                    in_channels=Cin, out_channels=Cout,
                                    matmul_dtype=jnp.float32)
    d32 = jnp.abs(out - ref_f32)
    assert float(jnp.mean(d32)) < 0.5 * step, float(jnp.mean(d32))
    assert float(jnp.mean((d32 > 1e-3).astype(jnp.float32))) < 0.5

    print("KERNEL_OK")
</pallas_src>

<mosaic_0001>
module attributes {stable_mosaic.version = 11 : i64} {
  func.func @kernel(%arg0: i32, %arg1: memref<8x16x64xf32, #tpu.memory_space<vmem>>, %arg2: memref<192x128xbf16, #tpu.memory_space<vmem>>, %arg3: memref<1x128xf32, #tpu.memory_space<vmem>>, %arg4: memref<448x128xbf16, #tpu.memory_space<vmem>>, %arg5: memref<1x128xf32, #tpu.memory_space<vmem>>, %arg6: memref<8x16x128xf32, #tpu.memory_space<vmem>>, %arg7: memref<8x16x192xf32, #tpu.memory_space<vmem>>, %arg8: memref<8x16x448xf32, #tpu.memory_space<vmem>>) attributes {dimension_semantics = [#tpu.dimension_semantics<parallel>], iteration_bounds = array<i64: 2>, scalar_prefetch = 0 : i64, scratch_operands = 2 : i64, tpu.core_type = #tpu.core_type<tc>, window_params = [{transform_indices = @transform_0, window_bounds = array<i64: 8, 16, 64>}, {pipeline_mode = #tpu.pipeline_mode<synchronous>, transform_indices = @transform_1, window_bounds = array<i64: 192, 128>}, {pipeline_mode = #tpu.pipeline_mode<synchronous>, transform_indices = @transform_2, window_bounds = array<i64: 1, 128>}, {pipeline_mode = #tpu.pipeline_mode<synchronous>, transform_indices = @transform_3, window_bounds = array<i64: 448, 128>}, {pipeline_mode = #tpu.pipeline_mode<synchronous>, transform_indices = @transform_4, window_bounds = array<i64: 1, 128>}, {transform_indices = @transform_5, window_bounds = array<i64: 8, 16, 128>}]} {
    %c0 = arith.constant 0 : index
    %c0_0 = arith.constant 0 : index
    %c0_1 = arith.constant 0 : index
    %0 = vector.load %arg1[%c0, %c0_0, %c0_1] : memref<8x16x64xf32, #tpu.memory_space<vmem>>, vector<8x16x64xf32>
    %cst = arith.constant 0.000000e+00 : f32
    %1 = vector.broadcast %cst : f32 to vector<8x1x64xf32>
    %c0_2 = arith.constant 0 : index
    %c0_3 = arith.constant 0 : index
    %c0_4 = arith.constant 0 : index
    %2 = vector.load %arg7[%c0_2, %c0_3, %c0_4] : memref<8x16x192xf32, #tpu.memory_space<vmem>>, vector<8x1x64xf32>
    tpu.vector_store %arg7[%c0_2, %c0_3, %c0_4], %1 {strides = array<i32>} : memref<8x16x192xf32, #tpu.memory_space<vmem>>, vector<8x1x64xf32>,
    %3 = vector.extract_strided_slice %0 {offsets = [0, 0, 0], sizes = [8, 15, 64], strides = [1, 1, 1]} : vector<8x16x64xf32> to vector<8x15x64xf32>
    %c0_5 = arith.constant 0 : index
    %c1 = arith.constant 1 : index
    %c0_6 = arith.constant 0 : index
    %4 = vector.load %arg7[%c0_5, %c1, %c0_6] : memref<8x16x192xf32, #tpu.memory_space<vmem>>, vector<8x15x64xf32>
    tpu.vector_store %arg7[%c0_5, %c1, %c0_6], %3 {strides = array<i32>} : memref<8x16x192xf32, #tpu.memory_space<vmem>>, vector<8x15x64xf32>,
    %c0_7 = arith.constant 0 : index
    %c0_8 = arith.constant 0 : index
    %c64 = arith.constant 64 : index
    %5 = vector.load %arg7[%c0_7, %c0_8, %c64] : memref<8x16x192xf32, #tpu.memory_space<vmem>>, vector<8x16x64xf32>
    tpu.vector_store %arg7[%c0_7, %c0_8, %c64], %0 {strides = array<i32>} : memref<8x16x192xf32, #tpu.memory_space<vmem>>, vector<8x16x64xf32>,
    %6 = vector.extract_strided_slice %0 {offsets = [0, 1, 0], sizes = [8, 15, 64], strides = [1, 1, 1]} : vector<8x16x64xf32> to vector<8x15x64xf32>
    %c0_9 = arith.constant 0 : index
    %c0_10 = arith.constant 0 : index
    %c128 = arith.constant 128 : index
    %7 = vector.load %arg7[%c0_9, %c0_10, %c128] : memref<8x16x192xf32, #tpu.memory_space<vmem>>, vector<8x15x64xf32>
    tpu.vector_store %arg7[%c0_9, %c0_10, %c128], %6 {strides = array<i32>} : memref<8x16x192xf32, #tpu.memory_space<vmem>>, vector<8x15x64xf32>,
    %cst_11 = arith.constant 0.000000e+00 : f32
    %8 = vector.broadcast %cst_11 : f32 to vector<8x1x64xf32>
    %c0_12 = arith.constant 0 : index
    %c15 = arith.constant 15 : index
    %c128_13 = arith.constant 128 : index
    %9 = vector.load %arg7[%c0_12, %c15, %c128_13] : memref<8x16x192xf32, #tpu.memory_space<vmem>>, vector<8x1x64xf32>
    tpu.vector_store %arg7[%c0_12, %c15, %c128_13], %8 {strides = array<i32>} : memref<8x16x192xf32, #tpu.memory_space<vmem>>, vector<8x1x64xf32>,
    %c0_14 = arith.constant 0 : index
    %c0_15 = arith.constant 0 : index
    %c0_16 = arith.constant 0 : index
    %10 = vector.load %arg7[%c0_14, %c0_15, %c0_16] : memref<8x16x192xf32, #tpu.memory_space<vmem>>, vector<8x16x192xf32>
    %11 = vector.shape_cast %10 : vector<8x16x192xf32> to vector<128x192xf32>
    %12 = arith.truncf %11 : vector<128x192xf32> to vector<128x192xbf16>
    %c0_17 = arith.constant 0 : index
    %c0_18 = arith.constant 0 : index
    %13 = vector.load %arg2[%c0_17, %c0_18] : memref<192x128xbf16, #tpu.memory_space<vmem>>, vector<192x128xbf16>
    %cst_19 = arith.constant dense<0.000000e+00> : vector<128x128xf32>
    %14 = tpu.matmul %12, %13, %cst_19 {dimension_numbers = #tpu.dot_dimension_numbers<[1], [0], [0], [1], [0, 0, 1, 1], [], []>} : vector<128x192xbf16>, vector<192x128xbf16>, vector<128x128xf32> -> vector<128x128xf32>
    %c0_20 = arith.constant 0 : index
    %c0_21 = arith.constant 0 : index
    %15 = vector.load %arg3[%c0_20, %c0_21] : memref<1x128xf32, #tpu.memory_space<vmem>>, vector<1x128xf32>
    %16 = vector.broadcast %15 : vector<1x128xf32> to vector<128x128xf32>
    %17 = arith.addf %14, %16 : vector<128x128xf32>
    %cst_22 = arith.constant 0.000000e+00 : f32
    %cst_23 = arith.constant 1.000000e+01 : f32
    %18 = vector.broadcast %cst_22 : f32 to vector<128x128xf32>
    %19 = arith.maximumf %18, %17 : vector<128x128xf32>
    %20 = vector.broadcast %cst_23 : f32 to vector<128x128xf32>
    %21 = arith.minimumf %20, %19 : vector<128x128xf32>
    %cst_24 = arith.constant 1.500000e+00 : f32
    %22 = vector.broadcast %cst_24 : f32 to vector<128x128xf32>
    %23 = arith.mulf %21, %22 : vector<128x128xf32>
    %24 = math.roundeven %23 : vector<128x128xf32>
    %cst_25 = arith.constant 0.666666686 : f32
    %25 = vector.broadcast %cst_25 : f32 to vector<128x128xf32>
    %26 = arith.mulf %24, %25 : vector<128x128xf32>
    %27 = vector.shape_cast %26 : vector<128x128xf32> to vector<8x16x128xf32>
    %cst_26 = arith.constant 0.000000e+00 : f32
    %28 = vector.broadcast %cst_26 : f32 to vector<8x1x128xf32>
    %c0_27 = arith.constant 0 : index
    %c0_28 = arith.constant 0 : index
    %c0_29 = arith.constant 0 : index
    %29 = vector.load %arg8[%c0_27, %c0_28, %c0_29] : memref<8x16x448xf32, #tpu.memory_space<vmem>>, vector<8x1x128xf32>
    tpu.vector_store %arg8[%c0_27, %c0_28, %c0_29], %28 {strides = array<i32>} : memref<8x16x448xf32, #tpu.memory_space<vmem>>, vector<8x1x128xf32>,
    %30 = vector.extract_strided_slice %27 {offsets = [0, 0, 0], sizes = [8, 15, 128], strides = [1, 1, 1]} : vector<8x16x128xf32> to vector<8x15x128xf32>
    %c0_30 = arith.constant 0 : index
    %c1_31 = arith.constant 1 : index
    %c0_32 = arith.constant 0 : index
    %31 = vector.load %arg8[%c0_30, %c1_31, %c0_32] : memref<8x16x448xf32, #tpu.memory_space<vmem>>, vector<8x15x128xf32>
    tpu.vector_store %arg8[%c0_30, %c1_31, %c0_32], %30 {strides = array<i32>} : memref<8x16x448xf32, #tpu.memory_space<vmem>>, vector<8x15x128xf32>,
    %c0_33 = arith.constant 0 : index
    %c0_34 = arith.constant 0 : index
    %c128_35 = arith.constant 128 : index
    %32 = vector.load %arg8[%c0_33, %c0_34, %c128_35] : memref<8x16x448xf32, #tpu.memory_space<vmem>>, vector<8x16x128xf32>
    tpu.vector_store %arg8[%c0_33, %c0_34, %c128_35], %27 {strides = array<i32>} : memref<8x16x448xf32, #tpu.memory_space<vmem>>, vector<8x16x128xf32>,
    %33 = vector.extract_strided_slice %27 {offsets = [0, 1, 0], sizes = [8, 15, 128], strides = [1, 1, 1]} : vector<8x16x128xf32> to vector<8x15x128xf32>
    %c0_36 = arith.constant 0 : index
    %c0_37 = arith.constant 0 : index
    %c256 = arith.constant 256 : index
    %34 = vector.load %arg8[%c0_36, %c0_37, %c256] : memref<8x16x448xf32, #tpu.memory_space<vmem>>, vector<8x15x128xf32>
    tpu.vector_store %arg8[%c0_36, %c0_37, %c256], %33 {strides = array<i32>} : memref<8x16x448xf32, #tpu.memory_space<vmem>>, vector<8x15x128xf32>,
    %cst_38 = arith.constant 0.000000e+00 : f32
    %35 = vector.broadcast %cst_38 : f32 to vector<8x1x128xf32>
    %c0_39 = arith.constant 0 : index
    %c15_40 = arith.constant 15 : index
    %c256_41 = arith.constant 256 : index
    %36 = vector.load %arg8[%c0_39, %c15_40, %c256_41] : memref<8x16x448xf32, #tpu.memory_space<vmem>>, vector<8x1x128xf32>
    tpu.vector_store %arg8[%c0_39, %c15_40, %c256_41], %35 {strides = array<i32>} : memref<8x16x448xf32, #tpu.memory_space<vmem>>, vector<8x1x128xf32>,
    %c0_42 = arith.constant 0 : index
    %c0_43 = arith.constant 0 : index
    %c384 = arith.constant 384 : index
    %37 = vector.load %arg8[%c0_42, %c0_43, %c384] : memref<8x16x448xf32, #tpu.memory_space<vmem>>, vector<8x16x64xf32>
    tpu.vector_store %arg8[%c0_42, %c0_43, %c384], %0 {strides = array<i32>} : memref<8x16x448xf32, #tpu.memory_space<vmem>>, vector<8x16x64xf32>,
    %c0_44 = arith.constant 0 : index
    %c0_45 = arith.constant 0 : index
    %c0_46 = arith.constant 0 : index
    %38 = vector.load %arg8[%c0_44, %c0_45, %c0_46] : memref<8x16x448xf32, #tpu.memory_space<vmem>>, vector<8x16x448xf32>
    %39 = vector.shape_cast %38 : vector<8x16x448xf32> to vector<128x448xf32>
    %40 = arith.truncf %39 : vector<128x448xf32> to vector<128x448xbf16>
    %c0_47 = arith.constant 0 : index
    %c0_48 = arith.constant 0 : index
    %41 = vector.load %arg4[%c0_47, %c0_48] : memref<448x128xbf16, #tpu.memory_space<vmem>>, vector<448x128xbf16>
    %cst_49 = arith.constant dense<0.000000e+00> : vector<128x128xf32>
    %42 = tpu.matmul %40, %41, %cst_49 {dimension_numbers = #tpu.dot_dimension_numbers<[1], [0], [0], [1], [0, 0, 1, 1], [], []>} : vector<128x448xbf16>, vector<448x128xbf16>, vector<128x128xf32> -> vector<128x128xf32>
    %c0_50 = arith.constant 0 : index
    %c0_51 = arith.constant 0 : index
    %43 = vector.load %arg5[%c0_50, %c0_51] : memref<1x128xf32, #tpu.memory_space<vmem>>, vector<1x128xf32>
    %44 = vector.broadcast %43 : vector<1x128xf32> to vector<128x128xf32>
    %45 = arith.addf %42, %44 : vector<128x128xf32>
    %cst_52 = arith.constant 0.000000e+00 : f32
    %cst_53 = arith.constant 1.000000e+01 : f32
    %46 = vector.broadcast %cst_52 : f32 to vector<128x128xf32>
    %47 = arith.maximumf %46, %45 : vector<128x128xf32>
    %48 = vector.broadcast %cst_53 : f32 to vector<128x128xf32>
    %49 = arith.minimumf %48, %47 : vector<128x128xf32>
    %cst_54 = arith.constant 1.500000e+00 : f32
    %50 = vector.broadcast %cst_54 : f32 to vector<128x128xf32>
    %51 = arith.mulf %49, %50 : vector<128x128xf32>
    %52 = math.roundeven %51 : vector<128x128xf32>
    %cst_55 = arith.constant 0.666666686 : f32
    %53 = vector.broadcast %cst_55 : f32 to vector<128x128xf32>
    %54 = arith.mulf %52, %53 : vector<128x128xf32>
    %55 = vector.shape_cast %54 : vector<128x128xf32> to vector<8x16x128xf32>
    %c0_56 = arith.constant 0 : index
    %c0_57 = arith.constant 0 : index
    %c0_58 = arith.constant 0 : index
    %56 = vector.load %arg6[%c0_56, %c0_57, %c0_58] : memref<8x16x128xf32, #tpu.memory_space<vmem>>, vector<8x16x128xf32>
    tpu.vector_store %arg6[%c0_56, %c0_57, %c0_58], %55 {strides = array<i32>} : memref<8x16x128xf32, #tpu.memory_space<vmem>>, vector<8x16x128xf32>,
    return
  }
  func.func @transform_0(%arg0: i32) -> (i32, i32, i32) {
    %c0_i32 = arith.constant 0 : i32
    %c0_i32_0 = arith.constant 0 : i32
    %c0_i32_1 = arith.constant 0 : i32
    return %arg0, %c0_i32, %c0_i32_0 : i32, i32, i32
  }
  func.func @transform_1(%arg0: i32) -> (i32, i32) {
    %c0_i32 = arith.constant 0 : i32
    %c0_i32_0 = arith.constant 0 : i32
    %c0_i32_1 = arith.constant 0 : i32
    return %c0_i32, %c0_i32_0 : i32, i32
  }
  func.func @transform_2(%arg0: i32) -> (i32, i32) {
    %c0_i32 = arith.constant 0 : i32
    %c0_i32_0 = arith.constant 0 : i32
    %c0_i32_1 = arith.constant 0 : i32
    return %c0_i32, %c0_i32_0 : i32, i32
  }
  func.func @transform_3(%arg0: i32) -> (i32, i32) {
    %c0_i32 = arith.constant 0 : i32
    %c0_i32_0 = arith.constant 0 : i32
    %c0_i32_1 = arith.constant 0 : i32
    return %c0_i32, %c0_i32_0 : i32, i32
  }
  func.func @transform_4(%arg0: i32) -> (i32, i32) {
    %c0_i32 = arith.constant 0 : i32
    %c0_i32_0 = arith.constant 0 : i32
    %c0_i32_1 = arith.constant 0 : i32
    return %c0_i32, %c0_i32_0 : i32, i32
  }
  func.func @transform_5(%arg0: i32) -> (i32, i32, i32) {
    %c0_i32 = arith.constant 0 : i32
    %c0_i32_0 = arith.constant 0 : i32
    %c0_i32_1 = arith.constant 0 : i32
    return %arg0, %c0_i32, %c0_i32_0 : i32, i32, i32
  }
}

</mosaic_0001>

<llo_original>
// kernel: tpu_custom_call.1
$region0: #{tpu_custom_call.1}
  #allocation0 [shape = 'u32[]', space=smem, size = 0x4, offset = 0x4, fixed_abs, tag = 'smem constant byte address 0x4 - core index']
  #allocation1 [shape = 'u32[144,128]{1,0:T(1,128)}', space=vmem, size = 0x12000, scoped, tag = 'internal scratch']
  #allocation2 [shape = 'f32[8,16,192]{2,1,0:T(8,128)}', space=vmem, size = 0x20000, scoped, tag = 'scratch operand']
  #allocation3 [shape = 'f32[8,16,448]{2,1,0:T(8,128)}', space=vmem, size = 0x40000, scoped, tag = 'scratch operand']
  %s0 = inlined_call_operand.hbm [shape: f32[16,16,64], index: 0, kind: input, shape index: {}]
  %s1 = inlined_call_operand.hbm [shape: bf16[192,128], index: 1, kind: input, shape index: {}]
  %s2 = inlined_call_operand.vmem [shape: f32[1,128], index: 2, kind: input, shape index: {}]
  %s3 = inlined_call_operand.hbm [shape: bf16[448,128], index: 3, kind: input, shape index: {}]
  %s4 = inlined_call_operand.vmem [shape: f32[1,128], index: 4, kind: input, shape index: {}]
  %s5 = inlined_call_operand.hbm [shape: f32[16,16,128], index: 5, kind: output, shape index: {}]
  %s6 = sld [smem:[#allocation0]]
  $region65: #{tpu_custom_call.1} parent=0
    _
  %s8 = ssub.s32 1, %s6
  %s9 = scalar_select 0, %s8, %s6
  $region1: #{tpu_custom_call.1} parent=0
    #allocation4 [shape = 'u8[131072]{0}', space=vmem, size = 0x20000, scoped, tag = 'input window, operand 0']
    #allocation5 [shape = 's32[2]{0}', space=sflag, size = 0x8, scoped, tag = 'scoped memory for tpu_custom_call.1']
    #allocation6 [shape = 's32[2]{0}', space=sflag, size = 0x8, scoped, tag = 'scoped memory for tpu_custom_call.1']
    #allocation7 [shape = 'u8[49152]{0}', space=vmem, size = 0xc000, scoped, tag = 'input window, operand 1, single buffered']
    #allocation8 [shape = 's32[1]{0}', space=sflag, size = 0x4, scoped, tag = 'scoped memory for tpu_custom_call.1']
    #allocation9 [shape = 'u8[114688]{0}', space=vmem, size = 0x1c000, scoped, tag = 'input window, operand 3, single buffered']
    #allocation10 [shape = 'u8[131072]{0}', space=vmem, size = 0x20000, scoped, tag = 'output window, operand 0']
    %10 = vsyncpa [#allocation5], 0
    %s11 = scalar_lea.sflag [#allocation5], 1
    %12 = vsyncpa %s11, 0
    %13 = vsyncpa [#allocation8], 0
    %14 = vsyncpa [#allocation6], 0
    %s15 = scalar_lea.sflag [#allocation6], 1
    %16 = vsyncpa %s15, 0
    loop: start=0, step=1, limit=4
    $region2: #{tpu_custom_call.1} parent=1 // loop_pre_header
      _
    $region3: #{tpu_custom_call.1} parent=1 // loop_header
      %s18 = sphi 0, %s22
      %p19 = scmp.ge.s32.totalorder %s18, 4
      %s28 = sphi 0, %s30
      %s31 = sphi 0, %s28
      %s32 = sphi 0, %s31
      %s48 = sphi 0, %s32
      %s52 = sphi 0, %s52
      %s54 = sphi 0, %s52
      %s55 = sphi 0, %s54
      %s69 = sphi 0, %s55
      %s73 = sphi 0, %s73
      %s75 = sphi 0, %s73
      %s76 = sphi 0, %s75
      %s90 = sphi 0, %s76
      %s94 = sphi 0, %s94
      %s96 = sphi 0, %s94
      %s97 = sphi 0, %s96
      %s111 = sphi 0, %s97
      %s115 = sphi 0, %s115
      %s117 = sphi 0, %s115
      %s118 = sphi 0, %s117
      %s132 = sphi 0, %s118
      %s138 = sphi 0, %s140
      %s141 = sphi 0, %s138
      %s142 = sphi 0, %s141
      %s158 = sphi 0, %s142
    $region4: #{tpu_custom_call.1} parent=1 // loop_header_branch
      %21 = sbr.rel (%p19) target = $region8
    $region5: #{tpu_custom_call.1} parent=1 // loop_body
      %s23 = ssub.s32 %s18, 1
      %s24 = ssub.s32 %s18, 2
      %s25 = sadd.s32 %s18, 1
      %s26 = ssub.s32 %s18, %s25
      %p27 = scmp.eq.s32.totalorder %s26, 0
      %s29 = sadd.s32 %s28, 1
      %s30 = scalar_select %p27, %s28, %s29
      %p33 = pneg %p27
      %p34 = scmp.eq.s32.totalorder %s18, 1
      %p35 = por %p33, %p34
      %p36 = scmp.ne.s32.totalorder %s28, %s31
      %p37 = scmp.eq.s32.totalorder %s18, 0
      %p38 = por %p36, %p37
      %p39 = scmp.ne.s32.totalorder %s28, %s31
      %p40 = scmp.eq.s32.totalorder %s23, 1
      %p41 = por %p39, %p40
      %p42 = scmp.ne.s32.totalorder %s31, %s32
      %p43 = scmp.eq.s32.totalorder %s23, 0
      %p44 = por %p42, %p43
      %p45 = scmp.ne.s32.totalorder %s31, %s32
      %p46 = scmp.eq.s32.totalorder %s24, 1
      %p47 = por %p45, %p46
      %p49 = scmp.ne.s32.totalorder %s32, %s48
      %p50 = scmp.eq.s32.totalorder %s24, 0
      %p51 = por %p49, %p50
      %s53 = sadd.s32 %s52, 1
      %p56 = scmp.eq.s32.totalorder %s18, 1
      %p57 = scmp.ne.s32.totalorder %s52, %s54
      %p58 = scmp.eq.s32.totalorder %s18, 0
      %p59 = por %p57, %p58
      %p60 = scmp.ne.s32.totalorder %s52, %s54
      %p61 = scmp.eq.s32.totalorder %s23, 1
      %p62 = por %p60, %p61
      %p63 = scmp.ne.s32.totalorder %s54, %s55
      %p64 = scmp.eq.s32.totalorder %s23, 0
      %p65 = por %p63, %p64
      %p66 = scmp.ne.s32.totalorder %s54, %s55
      %p67 = scmp.eq.s32.totalorder %s24, 1
      %p68 = por %p66, %p67
      %p70 = scmp.ne.s32.totalorder %s55, %s69
      %p71 = scmp.eq.s32.totalorder %s24, 0
      %p72 = por %p70, %p71
      %s74 = sadd.s32 %s73, 1
      %p77 = scmp.eq.s32.totalorder %s18, 1
      %p78 = scmp.ne.s32.totalorder %s73, %s75
      %p79 = scmp.eq.s32.totalorder %s18, 0
      %p80 = por %p78, %p79
      %p81 = scmp.ne.s32.totalorder %s73, %s75
      %p82 = scmp.eq.s32.totalorder %s23, 1
      %p83 = por %p81, %p82
      %p84 = scmp.ne.s32.totalorder %s75, %s76
      %p85 = scmp.eq.s32.totalorder %s23, 0
      %p86 = por %p84, %p85
      %p87 = scmp.ne.s32.totalorder %s75, %s76
      %p88 = scmp.eq.s32.totalorder %s24, 1
      %p89 = por %p87, %p88
      %p91 = scmp.ne.s32.totalorder %s76, %s90
      %p92 = scmp.eq.s32.totalorder %s24, 0
      %p93 = por %p91, %p92
      %s95 = sadd.s32 %s94, 1
      %p98 = scmp.eq.s32.totalorder %s18, 1
      %p99 = scmp.ne.s32.totalorder %s94, %s96
      %p100 = scmp.eq.s32.totalorder %s18, 0
      %p101 = por %p99, %p100
      %p102 = scmp.ne.s32.totalorder %s94, %s96
      %p103 = scmp.eq.s32.totalorder %s23, 1
      %p104 = por %p102, %p103
      %p105 = scmp.ne.s32.totalorder %s96, %s97
      %p106 = scmp.eq.s32.totalorder %s23, 0
      %p107 = por %p105, %p106
      %p108 = scmp.ne.s32.totalorder %s96, %s97
      %p109 = scmp.eq.s32.totalorder %s24, 1
      %p110 = por %p108, %p109
      %p112 = scmp.ne.s32.totalorder %s97, %s111
      %p113 = scmp.eq.s32.totalorder %s24, 0
      %p114 = por %p112, %p113
      %s116 = sadd.s32 %s115, 1
      %p119 = scmp.eq.s32.totalorder %s18, 1
      %p120 = scmp.ne.s32.totalorder %s115, %s117
      %p121 = scmp.eq.s32.totalorder %s18, 0
      %p122 = por %p120, %p121
      %p123 = scmp.ne.s32.totalorder %s115, %s117
      %p124 = scmp.eq.s32.totalorder %s23, 1
      %p125 = por %p123, %p124
      %p126 = scmp.ne.s32.totalorder %s117, %s118
      %p127 = scmp.eq.s32.totalorder %s23, 0
      %p128 = por %p126, %p127
      %p129 = scmp.ne.s32.totalorder %s117, %s118
      %p130 = scmp.eq.s32.totalorder %s24, 1
      %p131 = por %p129, %p130
      %p133 = scmp.ne.s32.totalorder %s118, %s132
      %p134 = scmp.eq.s32.totalorder %s24, 0
      %p135 = por %p133, %p134
      %s136 = ssub.s32 %s18, %s25
      %p137 = scmp.eq.s32.totalorder %s136, 0
      %s139 = sadd.s32 %s138, 1
      %s140 = scalar_select %p137, %s138, %s139
      %p143 = pneg %p137
      %p144 = scmp.eq.s32.totalorder %s18, 1
      %p145 = por %p143, %p144
      %p146 = scmp.ne.s32.totalorder %s138, %s141
      %p147 = scmp.eq.s32.totalorder %s18, 0
      %p148 = por %p146, %p147
      %p149 = scmp.ne.s32.totalorder %s138, %s141
      %p150 = scmp.eq.s32.totalorder %s23, 1
      %p151 = por %p149, %p150
      %p152 = scmp.ne.s32.totalorder %s141, %s142
      %p153 = scmp.eq.s32.totalorder %s23, 0
      %p154 = por %p152, %p153
      %p155 = scmp.ne.s32.totalorder %s141, %s142
      %p156 = scmp.eq.s32.totalorder %s24, 1
      %p157 = por %p155, %p156
      %p159 = scmp.ne.s32.totalorder %s142, %s158
      %p160 = scmp.eq.s32.totalorder %s24, 0
      %p161 = por %p159, %p160
      %p162 = scmp.le.s32.totalorder 1, %s18
      %p163 = scmp.lt.s32.totalorder %s18, 3
      %p164 = pnand %p162, %p163
      %p165 = pneg %p164
      // Predicated region
      $region9: #{tpu_custom_call.1} parent=5 // pred_check
        _
      $region10: #{tpu_custom_call.1} parent=5 // pred_check_branch
        %167 = sbr.rel (%p164) target = $region12
      $region11: #{tpu_custom_call.1} parent=5 // pred_region
        %s168 = ssub.s32 %s18, 1
        // Predicated region
        $region13: #{tpu_custom_call.1} parent=11 // pred_check
          %p169 = pneg %p65
        $region14: #{tpu_custom_call.1} parent=11 // pred_check_branch
          %171 = sbr.rel (%p169) target = $region16
        $region15: #{tpu_custom_call.1} parent=11 // pred_region
          %s173 = ssub.s32 1536, 1536
          %174 = vsyncadd [#allocation8], %s173
          %s175 = sshll.u32 [#allocation7], 4
          %s176 = int_to_ptr.vmem [resolvable:$true] %s175
          %181 = dma.hbm_to_vmem [thread:$0]  %s1, 1536, %s176, [#allocation8], 64, 64, 4
        $region16: #{tpu_custom_call.1} parent=11 // pred_fallthru
          _
        // Predicated region
        $region17: #{tpu_custom_call.1} parent=11 // pred_check
          %p182 = pneg %p86
        $region18: #{tpu_custom_call.1} parent=11 // pred_check_branch
          %184 = sbr.rel (%p182) target = $region20
        $region19: #{tpu_custom_call.1} parent=11 // pred_region
          _
        $region20: #{tpu_custom_call.1} parent=11 // pred_fallthru
          _
        // Predicated region
        $region21: #{tpu_custom_call.1} parent=11 // pred_check
          %p185 = pneg %p107
        $region22: #{tpu_custom_call.1} parent=11 // pred_check_branch
          %187 = sbr.rel (%p185) target = $region24
        $region23: #{tpu_custom_call.1} parent=11 // pred_region
          %s189 = ssub.s32 3584, 3584
          %190 = vsyncadd [#allocation8], %s189
          %s191 = sshll.u32 [#allocation9], 4
          %s192 = int_to_ptr.vmem [resolvable:$true] %s191
          %197 = dma.hbm_to_vmem [thread:$0]  %s3, 3584, %s192, [#allocation8], 64, 64, 4
        $region24: #{tpu_custom_call.1} parent=11 // pred_fallthru
          _
        // Predicated region
        $region25: #{tpu_custom_call.1} parent=11 // pred_check
          %p198 = pneg %p128
        $region26: #{tpu_custom_call.1} parent=11 // pred_check_branch
          %200 = sbr.rel (%p198) target = $region28
        $region27: #{tpu_custom_call.1} parent=11 // pred_region
          _
        $region28: #{tpu_custom_call.1} parent=11 // pred_fallthru
          _
      $region12: #{tpu_custom_call.1} parent=5 // pred_fallthru
        _
      %p201 = scmp.lt.s32.totalorder %s18, 2
      // Predicated region
      $region29: #{tpu_custom_call.1} parent=5 // pred_check
        %p202 = pneg %p201
      $region30: #{tpu_custom_call.1} parent=5 // pred_check_branch
        %204 = sbr.rel (%p202) target = $region32
      $region31: #{tpu_custom_call.1} parent=5 // pred_region
        // Predicated region
        $region33: #{tpu_custom_call.1} parent=31 // pred_check
          %p205 = pneg %p38
        $region34: #{tpu_custom_call.1} parent=31 // pred_check_branch
          %207 = sbr.rel (%p205) target = $region36
        $region35: #{tpu_custom_call.1} parent=31 // pred_region
          %s208 = sand.u32 %s28, 1
          %s209 = scalar_lea.sflag [#allocation5], %s208
          %s210 = sand.u32 %s28, 1
          %s211 = smul.addr %s210, 128
          %s212 = scalar_lea.vmem [#allocation4], %s211
          %s213 = smul.u32 8, %s18
          %s215 = ssub.s32 2048, 2048
          %216 = vsyncadd %s209, %s215
          %s217 = smul.addr %s213, 2
          %s218 = smul.addr %s217, 128
          %s219 = scalar_lea.hbm %s0, %s218
          %s220 = sshll.u32 %s212, 4
          %s221 = int_to_ptr.vmem [resolvable:$true] %s220
          %226 = dma.hbm_to_vmem [thread:$0]  %s219, 2048, %s221, %s209, 128, 128, 8
        $region36: #{tpu_custom_call.1} parent=31 // pred_fallthru
          _
      $region32: #{tpu_custom_call.1} parent=5 // pred_fallthru
        _
      %p227 = scmp.le.s32.totalorder 1, %s18
      %p228 = scmp.lt.s32.totalorder %s18, 3
      %p229 = pnand %p227, %p228
      %p230 = pneg %p229
      // Predicated region
      $region37: #{tpu_custom_call.1} parent=5 // pred_check
        _
      $region38: #{tpu_custom_call.1} parent=5 // pred_check_branch
        %232 = sbr.rel (%p229) target = $region40
      $region39: #{tpu_custom_call.1} parent=5 // pred_region
        %s233 = ssub.s32 %s18, 1
        %s234 = sand.u32 %s31, 1
        %s235 = scalar_lea.sflag [#allocation5], %s234
        %s236 = sand.u32 %s31, 1
        %s237 = smul.addr %s236, 128
        %s238 = scalar_lea.vmem [#allocation4], %s237
        // Predicated region
        $region41: #{tpu_custom_call.1} parent=39 // pred_check
          %p239 = pneg %p44
        $region42: #{tpu_custom_call.1} parent=39 // pred_check_branch
          %241 = sbr.rel (%p239) target = $region44
        $region43: #{tpu_custom_call.1} parent=39 // pred_region
          %242 = dma.done %s235, 2048
        $region44: #{tpu_custom_call.1} parent=39 // pred_fallthru
          _
        // Predicated region
        $region45: #{tpu_custom_call.1} parent=39 // pred_check
          %p243 = pneg %p65
        $region46: #{tpu_custom_call.1} parent=39 // pred_check_branch
          %245 = sbr.rel (%p243) target = $region48
        $region47: #{tpu_custom_call.1} parent=39 // pred_region
          %246 = dma.done [#allocation8], 1536
        $region48: #{tpu_custom_call.1} parent=39 // pred_fallthru
          _
        // Predicated region
        $region49: #{tpu_custom_call.1} parent=39 // pred_check
          %p247 = pneg %p107
        $region50: #{tpu_custom_call.1} parent=39 // pred_check_branch
          %249 = sbr.rel (%p247) target = $region52
        $region51: #{tpu_custom_call.1} parent=39 // pred_region
          %250 = dma.done [#allocation8], 3584
        $region52: #{tpu_custom_call.1} parent=39 // pred_fallthru
          _
        %s251 = sand.u32 %s31, 1
        %s252 = scalar_lea.sflag [#allocation5], %s251
        %s253 = sand.u32 %s31, 1
        %s254 = smul.addr %s253, 128
        %s255 = scalar_lea.vmem [#allocation4], %s254
        %p256 = pneg %p44
        %p257 = pneg %p41
        %p258 = pneg %p65
        %p259 = pneg %p62
        %p260 = pneg %p86
        %p261 = pneg %p83
        %p262 = pneg %p107
        %p263 = pneg %p104
        %p264 = pneg %p128
        %p265 = pneg %p125
        %p266 = pneg %p154
        %p267 = pneg %p151
        %s268 = sand.u32 %s141, 1
        %s269 = scalar_lea.sflag [#allocation6], %s268
        %s270 = sand.u32 %s141, 1
        %s271 = smul.addr %s270, 128
        %s272 = scalar_lea.vmem [#allocation10], %s271
        %s273 = smul.u32 8, %s23
        %s274 = smul.u32 8, %s23
        %v276 = vld [vmem:[%s238] sm:$0xff]
        %v277 = vld [vmem:[%s238 + $0x8] sm:$0xff]
        %v278 = vld [vmem:[%s238 + $0x10] sm:$0xff]
        %v279 = vld [vmem:[%s238 + $0x18] sm:$0xff]
        %v280 = vld [vmem:[%s238 + $0x20] sm:$0xff]
        %v281 = vld [vmem:[%s238 + $0x28] sm:$0xff]
        %v282 = vld [vmem:[%s238 + $0x30] sm:$0xff]
        %v283 = vld [vmem:[%s238 + $0x38] sm:$0xff]
        %v284 = vld [vmem:[%s238 + $0x40] sm:$0xff]
        %v285 = vld [vmem:[%s238 + $0x48] sm:$0xff]
        %v286 = vld [vmem:[%s238 + $0x50] sm:$0xff]
        %v287 = vld [vmem:[%s238 + $0x58] sm:$0xff]
        %v288 = vld [vmem:[%s238 + $0x60] sm:$0xff]
        %v289 = vld [vmem:[%s238 + $0x68] sm:$0xff]
        %v290 = vld [vmem:[%s238 + $0x70] sm:$0xff]
        %v291 = vld [vmem:[%s238 + $0x78] sm:$0xff]
        %vm292 = vcmask 516096
        %293 = vst.msk [vmem:[#allocation2] sm:$0x1] %vm292, 0.0
        %294 = vst.msk [vmem:[#allocation2 + $0x20] sm:$0x1] %vm292, 0.0
        %295 = vst.msk [vmem:[#allocation2 + $0x40] sm:$0x1] %vm292, 0.0
        %296 = vst.msk [vmem:[#allocation2 + $0x60] sm:$0x1] %vm292, 0.0
        %297 = vst.msk [vmem:[#allocation2 + $0x80] sm:$0x1] %vm292, 0.0
        %298 = vst.msk [vmem:[#allocation2 + $0xa0] sm:$0x1] %vm292, 0.0
        %299 = vst.msk [vmem:[#allocation2 + $0xc0] sm:$0x1] %vm292, 0.0
        %300 = vst.msk [vmem:[#allocation2 + $0xe0] sm:$0x1] %vm292, 0.0
        %vm317 = vcmask 1040384
        %v318 = vrot.slane %v276, 7
        %v319 = vrot.slane %v277, 7
        %v320 = vsel %vm317, %v318, %v319
        %v321 = vrot.slane %v278, 7
        %v322 = vrot.slane %v279, 7
        %v323 = vsel %vm317, %v321, %v322
        %v324 = vrot.slane %v280, 7
        %v325 = vrot.slane %v281, 7
        %v326 = vsel %vm317, %v324, %v325
        %v327 = vrot.slane %v282, 7
        %v328 = vrot.slane %v283, 7
        %v329 = vsel %vm317, %v327, %v328
        %v330 = vrot.slane %v284, 7
        %v331 = vrot.slane %v285, 7
        %v332 = vsel %vm317, %v330, %v331
        %v333 = vrot.slane %v286, 7
        %v334 = vrot.slane %v287, 7
        %v335 = vsel %vm317, %v333, %v334
        %v336 = vrot.slane %v288, 7
        %v337 = vrot.slane %v289, 7
        %v338 = vsel %vm317, %v336, %v337
        %v339 = vrot.slane %v290, 7
        %v340 = vrot.slane %v291, 7
        %v341 = vsel %vm317, %v339, %v340
        %vm358 = vcmask 523265
        %359 = vst.msk [vmem:[#allocation2] sm:$0xfe] %vm358, %v318
        %vm360 = vcmask 523264
        %361 = vst.msk [vmem:[#allocation2 + $0x10] sm:$0xff] %vm360, %v320
        %362 = vst.msk [vmem:[#allocation2 + $0x20] sm:$0xfe] %vm358, %v321
        %363 = vst.msk [vmem:[#allocation2 + $0x30] sm:$0xff] %vm360, %v323
        %364 = vst.msk [vmem:[#allocation2 + $0x40] sm:$0xfe] %vm358, %v324
        %365 = vst.msk [vmem:[#allocation2 + $0x50] sm:$0xff] %vm360, %v326
        %366 = vst.msk [vmem:[#allocation2 + $0x60] sm:$0xfe] %vm358, %v327
        %367 = vst.msk [vmem:[#allocation2 + $0x70] sm:$0xff] %vm360, %v329
        %368 = vst.msk [vmem:[#allocation2 + $0x80] sm:$0xfe] %vm358, %v330
        %369 = vst.msk [vmem:[#allocation2 + $0x90] sm:$0xff] %vm360, %v332
        %370 = vst.msk [vmem:[#allocation2 + $0xa0] sm:$0xfe] %vm358, %v333
        %371 = vst.msk [vmem:[#allocation2 + $0xb0] sm:$0xff] %vm360, %v335
        %372 = vst.msk [vmem:[#allocation2 + $0xc0] sm:$0xfe] %vm358, %v336
        %373 = vst.msk [vmem:[#allocation2 + $0xd0] sm:$0xff] %vm360, %v338
        %374 = vst.msk [vmem:[#allocation2 + $0xe0] sm:$0xfe] %vm358, %v339
        %375 = vst.msk [vmem:[#allocation2 + $0xf0] sm:$0xff] %vm360, %v341
        %376 = vrot.lane.b32.xlu0 %v276, 64
        %v377 = vpop.permute.xlu0 %376
        %378 = vrot.lane.b32.xlu0 %v277, 64
        %v379 = vpop.permute.xlu0 %378
        %380 = vrot.lane.b32.xlu0 %v278, 64
        %v381 = vpop.permute.xlu0 %380
        %382 = vrot.lane.b32.xlu0 %v279, 64
        %v383 = vpop.permute.xlu0 %382
        %384 = vrot.lane.b32.xlu0 %v280, 64
        %v385 = vpop.permute.xlu0 %384
        %386 = vrot.lane.b32.xlu0 %v281, 64
        %v387 = vpop.permute.xlu0 %386
        %388 = vrot.lane.b32.xlu0 %v282, 64
        %v389 = vpop.permute.xlu0 %388
        %390 = vrot.lane.b32.xlu0 %v283, 64
        %v391 = vpop.permute.xlu0 %390
        %392 = vrot.lane.b32.xlu0 %v284, 64
        %v393 = vpop.permute.xlu0 %392
        %394 = vrot.lane.b32.xlu0 %v285, 64
        %v395 = vpop.permute.xlu0 %394
        %396 = vrot.lane.b32.xlu0 %v286, 64
        %v397 = vpop.permute.xlu0 %396
        %398 = vrot.lane.b32.xlu0 %v287, 64
        %v399 = vpop.permute.xlu0 %398
        %400 = vrot.lane.b32.xlu0 %v288, 64
        %v401 = vpop.permute.xlu0 %400
        %402 = vrot.lane.b32.xlu0 %v289, 64
        %v403 = vpop.permute.xlu0 %402
        %404 = vrot.lane.b32.xlu0 %v290, 64
        %v405 = vpop.permute.xlu0 %404
        %406 = vrot.lane.b32.xlu0 %v291, 64
        %v407 = vpop.permute.xlu0 %406
        %vm424 = vcmask 1048064
        %425 = vst.msk [vmem:[#allocation2] sm:$0xff] %vm424, %v377
        %426 = vst.msk [vmem:[#allocation2 + $0x10] sm:$0xff] %vm424, %v379
        %427 = vst.msk [vmem:[#allocation2 + $0x20] sm:$0xff] %vm424, %v381
        %428 = vst.msk [vmem:[#allocation2 + $0x30] sm:$0xff] %vm424, %v383
        %429 = vst.msk [vmem:[#allocation2 + $0x40] sm:$0xff] %vm424, %v385
        %430 = vst.msk [vmem:[#allocation2 + $0x50] sm:$0xff] %vm424, %v387
        %431 = vst.msk [vmem:[#allocation2 + $0x60] sm:$0xff] %vm424, %v389
        %432 = vst.msk [vmem:[#allocation2 + $0x70] sm:$0xff] %vm424, %v391
        %433 = vst.msk [vmem:[#allocation2 + $0x80] sm:$0xff] %vm424, %v393
        %434 = vst.msk [vmem:[#allocation2 + $0x90] sm:$0xff] %vm424, %v395
        %435 = vst.msk [vmem:[#allocation2 + $0xa0] sm:$0xff] %vm424, %v397
        %436 = vst.msk [vmem:[#allocation2 + $0xb0] sm:$0xff] %vm424, %v399
        %437 = vst.msk [vmem:[#allocation2 + $0xc0] sm:$0xff] %vm424, %v401
        %438 = vst.msk [vmem:[#allocation2 + $0xd0] sm:$0xff] %vm424, %v403
        %439 = vst.msk [vmem:[#allocation2 + $0xe0] sm:$0xff] %vm424, %v405
        %440 = vst.msk [vmem:[#allocation2 + $0xf0] sm:$0xff] %vm424, %v407
        %vm441 = vcmask 1046528
        %v442 = vrot.slane %v276, 1
        %v443 = vrot.slane %v277, 1
        %v444 = vsel %vm441, %v442, %v443
        %v445 = vrot.slane %v278, 1
        %v446 = vrot.slane %v279, 1
        %v447 = vsel %vm441, %v445, %v446
        %v448 = vrot.slane %v280, 1
        %v449 = vrot.slane %v281, 1
        %v450 = vsel %vm441, %v448, %v449
        %v451 = vrot.slane %v282, 1
        %v452 = vrot.slane %v283, 1
        %v453 = vsel %vm441, %v451, %v452
        %v454 = vrot.slane %v284, 1
        %v455 = vrot.slane %v285, 1
        %v456 = vsel %vm441, %v454, %v455
        %v457 = vrot.slane %v286, 1
        %v458 = vrot.slane %v287, 1
        %v459 = vsel %vm441, %v457, %v458
        %v460 = vrot.slane %v288, 1
        %v461 = vrot.slane %v289, 1
        %v462 = vsel %vm441, %v460, %v461
        %v463 = vrot.slane %v290, 1
        %v464 = vrot.slane %v291, 1
        %v465 = vsel %vm441, %v463, %v464
        %482 = vst.msk [vmem:[#allocation2 + $0x8] sm:$0xff] %vm360, %v444
        %vm483 = vcmask 522240
        %484 = vst.msk [vmem:[#allocation2 + $0x18] sm:$0x7f] %vm483, %v443
        %485 = vst.msk [vmem:[#allocation2 + $0x28] sm:$0xff] %vm360, %v447
        %486 = vst.msk [vmem:[#allocation2 + $0x38] sm:$0x7f] %vm483, %v446
        %487 = vst.msk [vmem:[#allocation2 + $0x48] sm:$0xff] %vm360, %v450
        %488 = vst.msk [vmem:[#allocation2 + $0x58] sm:$0x7f] %vm483, %v449
        %489 = vst.msk [vmem:[#allocation2 + $0x68] sm:$0xff] %vm360, %v453
        %490 = vst.msk [vmem:[#allocation2 + $0x78] sm:$0x7f] %vm483, %v452
        %491 = vst.msk [vmem:[#allocation2 + $0x88] sm:$0xff] %vm360, %v456
        %492 = vst.msk [vmem:[#allocation2 + $0x98] sm:$0x7f] %vm483, %v455
        %493 = vst.msk [vmem:[#allocation2 + $0xa8] sm:$0xff] %vm360, %v459
        %494 = vst.msk [vmem:[#allocation2 + $0xb8] sm:$0x7f] %vm483, %v458
        %495 = vst.msk [vmem:[#allocation2 + $0xc8] sm:$0xff] %vm360, %v462
        %496 = vst.msk [vmem:[#allocation2 + $0xd8] sm:$0x7f] %vm483, %v461
        %497 = vst.msk [vmem:[#allocation2 + $0xe8] sm:$0xff] %vm360, %v465
        %498 = vst.msk [vmem:[#allocation2 + $0xf8] sm:$0x7f] %vm483, %v464
        %499 = vst.msk [vmem:[#allocation2 + $0x1f] sm:$0x1] %vm292, 0.0
        %500 = vst.msk [vmem:[#allocation2 + $0x3f] sm:$0x1] %vm292, 0.0
        %501 = vst.msk [vmem:[#allocation2 + $0x5f] sm:$0x1] %vm292, 0.0
        %502 = vst.msk [vmem:[#allocation2 + $0x7f] sm:$0x1] %vm292, 0.0
        %503 = vst.msk [vmem:[#allocation2 + $0x9f] sm:$0x1] %vm292, 0.0
        %504 = vst.msk [vmem:[#allocation2 + $0xbf] sm:$0x1] %vm292, 0.0
        %505 = vst.msk [vmem:[#allocation2 + $0xdf] sm:$0x1] %vm292, 0.0
        %506 = vst.msk [vmem:[#allocation2 + $0xff] sm:$0x1] %vm292, 0.0
        %v507 = vld [vmem:[#allocation2] sm:$0xff]
        %v508 = vld [vmem:[#allocation2 + $0x8] sm:$0xff]
        %v509 = vld [vmem:[#allocation2 + $0x10] sm:$0xff]
        %v510 = vld [vmem:[#allocation2 + $0x18] sm:$0xff]
        %v511 = vld [vmem:[#allocation2 + $0x20] sm:$0xff]
        %v512 = vld [vmem:[#allocation2 + $0x28] sm:$0xff]
        %v513 = vld [vmem:[#allocation2 + $0x30] sm:$0xff]
        %v514 = vld [vmem:[#allocation2 + $0x38] sm:$0xff]
        %v515 = vld [vmem:[#allocation2 + $0x40] sm:$0xff]
        %v516 = vld [vmem:[#allocation2 + $0x48] sm:$0xff]
        %v517 = vld [vmem:[#allocation2 + $0x50] sm:$0xff]
        %v518 = vld [vmem:[#allocation2 + $0x58] sm:$0xff]
        %v519 = vld [vmem:[#allocation2 + $0x60] sm:$0xff]
        %v520 = vld [vmem:[#allocation2 + $0x68] sm:$0xff]
        %v521 = vld [vmem:[#allocation2 + $0x70] sm:$0xff]
        %v522 = vld [vmem:[#allocation2 + $0x78] sm:$0xff]
        %v523 = vld [vmem:[#allocation2 + $0x80] sm:$0xff]
        %v524 = vld [vmem:[#allocation2 + $0x88] sm:$0xff]
        %v525 = vld [vmem:[#allocation2 + $0x90] sm:$0xff]
        %v526 = vld [vmem:[#allocation2 + $0x98] sm:$0xff]
        %v527 = vld [vmem:[#allocation2 + $0xa0] sm:$0xff]
        %v528 = vld [vmem:[#allocation2 + $0xa8] sm:$0xff]
        %v529 = vld [vmem:[#allocation2 + $0xb0] sm:$0xff]
        %v530 = vld [vmem:[#allocation2 + $0xb8] sm:$0xff]
        %v531 = vld [vmem:[#allocation2 + $0xc0] sm:$0xff]
        %v532 = vld [vmem:[#allocation2 + $0xc8] sm:$0xff]
        %v533 = vld [vmem:[#allocation2 + $0xd0] sm:$0xff]
        %v534 = vld [vmem:[#allocation2 + $0xd8] sm:$0xff]
        %v535 = vld [vmem:[#allocation2 + $0xe0] sm:$0xff]
        %v536 = vld [vmem:[#allocation2 + $0xe8] sm:$0xff]
        %v537 = vld [vmem:[#allocation2 + $0xf0] sm:$0xff]
        %v538 = vld [vmem:[#allocation2 + $0xf8] sm:$0xff]
        %v539 = vpack.c.bf16 %v509, %v507
        %v540 = vpack.c.bf16 %v510, %v508
        %v541 = vpack.c.bf16 %v513, %v511
        %v542 = vpack.c.bf16 %v514, %v512
        %v543 = vpack.c.bf16 %v517, %v515
        %v544 = vpack.c.bf16 %v518, %v516
        %v545 = vpack.c.bf16 %v521, %v519
        %v546 = vpack.c.bf16 %v522, %v520
        %v547 = vpack.c.bf16 %v525, %v523
        %v548 = vpack.c.bf16 %v526, %v524
        %v549 = vpack.c.bf16 %v529, %v527
        %v550 = vpack.c.bf16 %v530, %v528
        %v551 = vpack.c.bf16 %v533, %v531
        %v552 = vpack.c.bf16 %v534, %v532
        %v553 = vpack.c.bf16 %v537, %v535
        %v554 = vpack.c.bf16 %v538, %v536
        %v555 = vld [vmem:[#allocation7] sm:$0xf]
        %v556 = vld [vmem:[#allocation7 + $0x4] sm:$0xf]
        %v557 = vld [vmem:[#allocation7 + $0x8] sm:$0xf]
        %v558 = vld [vmem:[#allocation7 + $0xc] sm:$0xf]
        %v559 = vld [vmem:[#allocation7 + $0x10] sm:$0xf]
        %v560 = vld [vmem:[#allocation7 + $0x14] sm:$0xf]
        %v561 = vld [vmem:[#allocation7 + $0x18] sm:$0xf]
        %v562 = vld [vmem:[#allocation7 + $0x1c] sm:$0xf]
        %v563 = vld [vmem:[#allocation7 + $0x20] sm:$0xf]
        %v564 = vld [vmem:[#allocation7 + $0x24] sm:$0xf]
        %v565 = vld [vmem:[#allocation7 + $0x28] sm:$0xf]
        %v566 = vld [vmem:[#allocation7 + $0x2c] sm:$0xf]
        %v567 = vld [vmem:[#allocation7 + $0x30] sm:$0xf]
        %v568 = vld [vmem:[#allocation7 + $0x34] sm:$0xf]
        %v569 = vld [vmem:[#allocation7 + $0x38] sm:$0xf]
        %v570 = vld [vmem:[#allocation7 + $0x3c] sm:$0xf]
        %v571 = vld [vmem:[#allocation7 + $0x40] sm:$0xf]
        %v572 = vld [vmem:[#allocation7 + $0x44] sm:$0xf]
        %v573 = vld [vmem:[#allocation7 + $0x48] sm:$0xf]
        %v574 = vld [vmem:[#allocation7 + $0x4c] sm:$0xf]
        %v575 = vld [vmem:[#allocation7 + $0x50] sm:$0xf]
        %v576 = vld [vmem:[#allocation7 + $0x54] sm:$0xf]
        %v577 = vld [vmem:[#allocation7 + $0x58] sm:$0xf]
        %v578 = vld [vmem:[#allocation7 + $0x5c] sm:$0xf]
        %v579 = vld [vmem:[%s2] sm:$0x1]
        %v581 = vlaneseq
        %v582 = vshrl.u32 %v581, 7
        %v583 = vsub.s32 0, %v582
        %v584 = vrot.slane %v579, %v583
        %v610 = vunpack.c.l.b16 %v555
        %v611 = vunpack.c.l.b16 %v556
        %v612 = vunpack.c.l.b16 %v557
        %v613 = vunpack.c.l.b16 %v558
        %v614 = vunpack.c.l.b16 %v559
        %v615 = vunpack.c.l.b16 %v560
        %v616 = vunpack.c.l.b16 %v561
        %v617 = vunpack.c.l.b16 %v562
        %v618 = vunpack.c.l.b16 %v563
        %v619 = vunpack.c.l.b16 %v564
        %v620 = vunpack.c.l.b16 %v565
        %v621 = vunpack.c.l.b16 %v566
        %v622 = vunpack.c.l.b16 %v567
        %v623 = vunpack.c.l.b16 %v568
        %v624 = vunpack.c.l.b16 %v569
        %v625 = vunpack.c.l.b16 %v570
        %v626 = vunpack.c.l.b16 %v571
        %v627 = vunpack.c.l.b16 %v572
        %v628 = vunpack.c.l.b16 %v573
        %v629 = vunpack.c.l.b16 %v574
        %v630 = vunpack.c.l.b16 %v575
        %v631 = vunpack.c.l.b16 %v576
        %v632 = vunpack.c.l.b16 %v577
        %v633 = vunpack.c.l.b16 %v578
        %v634 = vpack.c.b16 %v611, %v610
        %v635 = vpack.c.b16 %v613, %v612
        %v636 = vpack.c.b16 %v615, %v614
        %v637 = vpack.c.b16 %v617, %v616
        %v638 = vpack.c.b16 %v619, %v618
        %v639 = vpack.c.b16 %v621, %v620
        %v640 = vpack.c.b16 %v623, %v622
        %v641 = vpack.c.b16 %v625, %v624
        %v642 = vpack.c.b16 %v627, %v626
        %v643 = vpack.c.b16 %v629, %v628
        %v644 = vpack.c.b16 %v631, %v630
        %v645 = vpack.c.b16 %v633, %v632
        %v659 = vsel %vm360, %v540, 0
        %v662 = vsel %vm360, %v542, 0
        %v665 = vsel %vm360, %v544, 0
        %v668 = vsel %vm360, %v546, 0
        %v671 = vsel %vm360, %v548, 0
        %v674 = vsel %vm360, %v550, 0
        %v677 = vsel %vm360, %v552, 0
        %v680 = vsel %vm360, %v554, 0
        %682 = vmatprep.subr.bf16.mxu0 0
        %683 = vmatpush1.bf16.msra.mxu0 %v634
        %684 = vmatprep.subr.bf16.mxu0 0
        %685 = vmatpush1.bf16.msra.mxu0 %v635
        %686 = vmatprep.subr.bf16.mxu0 0
        %687 = vmatpush1.bf16.msra.mxu0 %v636
        %688 = vmatprep.subr.bf16.mxu0 0
        %689 = vmatpush1.bf16.msra.mxu0 %v637
        %690 = vmatprep.subr.bf16.mxu0 0
        %691 = vmatpush1.bf16.msra.mxu0 %v638
        %692 = vmatprep.subr.bf16.mxu0 0
        %693 = vmatpush1.bf16.msra.mxu0 %v639
        %694 = vmatprep.subr.bf16.mxu0 0
        %695 = vmatpush1.bf16.msra.mxu0 %v640
        %696 = vmatprep.subr.bf16.mxu0 0
        %697 = vmatpush1.bf16.msra.mxu0 %v641
        %698 = vmatprep.subr.bf16.mxu0 0
        %699 = vmatpush1.bf16.msra.mxu0 %v642
        %700 = vmatprep.subr.bf16.mxu0 0
        %701 = vmatpush1.bf16.msra.mxu0 %v643
        %702 = vmatprep.subr.bf16.mxu0 0
        %703 = vmatpush1.bf16.msra.mxu0 %v644
        %704 = vmatprep.subr.bf16.mxu0 0
        %705 = vmatpush1.bf16.msra.mxu0 %v645
        %706 = vmatprep.subr.bf16.mxu0 0
        %707 = vmatpush1.bf16.msra.mxu0 0
        %708 = vmatprep.subr.bf16.mxu0 0
        %709 = vmatpush1.bf16.msra.mxu0 0
        %710 = vmatprep.subr.bf16.mxu0 0
        %711 = vmatpush1.bf16.msra.mxu0 0
        %712 = vmatprep.subr.bf16.mxu0 0
        %713 = vmatpush1.bf16.msra.mxu0 0
        %714 = vmatprep.mubr.bf16.mxu0 %v659
        %715 = vmatmul.mubr.bf16.gmra.mrb[0].mxu0 %v539
        %v716 = vpop.f32.mrb[0].mxu0
        %v717 = vadd.f32 %v584, %v716
        %v718 = vpop.f32.mrb[0].mxu0
        %v719 = vpop.f32.mrb[0].mxu0
        %v720 = vadd.f32 %v584, %v719
        %v721 = vpop.f32.mrb[0].mxu0
        %722 = vmatprep.mubr.bf16.mxu0 %v662
        %723 = vmatmul.mubr.bf16.gmra.mrb[0].mxu0 %v541
        %v724 = vpop.f32.mrb[0].mxu0
        %v725 = vadd.f32 %v584, %v724
        %v726 = vpop.f32.mrb[0].mxu0
        %v727 = vpop.f32.mrb[0].mxu0
        %v728 = vadd.f32 %v584, %v727
        %v729 = vpop.f32.mrb[0].mxu0
        %730 = vmatprep.mubr.bf16.mxu0 %v665
        %731 = vmatmul.mubr.bf16.gmra.mrb[0].mxu0 %v543
        %v732 = vpop.f32.mrb[0].mxu0
        %v733 = vadd.f32 %v584, %v732
        %v734 = vpop.f32.mrb[0].mxu0
        %v735 = vpop.f32.mrb[0].mxu0
        %v736 = vadd.f32 %v584, %v735
        %v737 = vpop.f32.mrb[0].mxu0
        %738 = vmatprep.mubr.bf16.mxu0 %v668
        %739 = vmatmul.mubr.bf16.gmra.mrb[0].mxu0 %v545
        %v740 = vpop.f32.mrb[0].mxu0
        %v741 = vadd.f32 %v584, %v740
        %v742 = vpop.f32.mrb[0].mxu0
        %v743 = vpop.f32.mrb[0].mxu0
        %v744 = vadd.f32 %v584, %v743
        %v745 = vpop.f32.mrb[0].mxu0
        %746 = vmatprep.mubr.bf16.mxu0 %v671
        %747 = vmatmul.mubr.bf16.gmra.mrb[0].mxu0 %v547
        %v748 = vpop.f32.mrb[0].mxu0
        %v749 = vadd.f32 %v584, %v748
        %v750 = vpop.f32.mrb[0].mxu0
        %v751 = vpop.f32.mrb[0].mxu0
        %v752 = vadd.f32 %v584, %v751
        %v753 = vpop.f32.mrb[0].mxu0
        %754 = vmatprep.mubr.bf16.mxu0 %v674
        %755 = vmatmul.mubr.bf16.gmra.mrb[0].mxu0 %v549
        %v756 = vpop.f32.mrb[0].mxu0
        %v757 = vadd.f32 %v584, %v756
        %v758 = vpop.f32.mrb[0].mxu0
        %v759 = vpop.f32.mrb[0].mxu0
        %v760 = vadd.f32 %v584, %v759
        %v761 = vpop.f32.mrb[0].mxu0
        %762 = vmatprep.mubr.bf16.mxu0 %v677
        %763 = vmatmul.mubr.bf16.gmra.mrb[0].mxu0 %v551
        %v764 = vpop.f32.mrb[0].mxu0
        %v765 = vadd.f32 %v584, %v764
        %v766 = vpop.f32.mrb[0].mxu0
        %v767 = vpop.f32.mrb[0].mxu0
        %v768 = vadd.f32 %v584, %v767
        %v769 = vpop.f32.mrb[0].mxu0
        %770 = vmatprep.mubr.bf16.mxu0 %v680
        %771 = vmatmul.mubr.bf16.gmra.mrb[0].mxu0 %v553
        %v772 = vpop.f32.mrb[0].mxu0
        %v773 = vadd.f32 %v584, %v772
        %v774 = vpop.f32.mrb[0].mxu0
        %v775 = vpop.f32.mrb[0].mxu0
        %v776 = vadd.f32 %v584, %v775
        %v777 = vpop.f32.mrb[0].mxu0
        %778 = vdwg.mxu0
        %v779 = vmax.f32 %v717, 0.0
        %v780 = vmax.f32 %v720, 0.0
        %v781 = vmax.f32 %v725, 0.0
        %v782 = vmax.f32 %v728, 0.0
        %v783 = vmax.f32 %v733, 0.0
        %v784 = vmax.f32 %v736, 0.0
        %v785 = vmax.f32 %v741, 0.0
        %v786 = vmax.f32 %v744, 0.0
        %v787 = vmax.f32 %v749, 0.0
        %v788 = vmax.f32 %v752, 0.0
        %v789 = vmax.f32 %v757, 0.0
        %v790 = vmax.f32 %v760, 0.0
        %v791 = vmax.f32 %v765, 0.0
        %v792 = vmax.f32 %v768, 0.0
        %v793 = vmax.f32 %v773, 0.0
        %v794 = vmax.f32 %v776, 0.0
        %v795 = vmin.f32 %v779, 10.0
        %v796 = vmin.f32 %v780, 10.0
        %v797 = vmin.f32 %v781, 10.0
        %v798 = vmin.f32 %v782, 10.0
        %v799 = vmin.f32 %v783, 10.0
        %v800 = vmin.f32 %v784, 10.0
        %v801 = vmin.f32 %v785, 10.0
        %v802 = vmin.f32 %v786, 10.0
        %v803 = vmin.f32 %v787, 10.0
        %v804 = vmin.f32 %v788, 10.0
        %v805 = vmin.f32 %v789, 10.0
        %v806 = vmin.f32 %v790, 10.0
        %v807 = vmin.f32 %v791, 10.0
        %v808 = vmin.f32 %v792, 10.0
        %v809 = vmin.f32 %v793, 10.0
        %v810 = vmin.f32 %v794, 10.0
        %v811 = vmul.f32 %v795, 1.5
        %v812 = vmul.f32 %v796, 1.5
        %v813 = vmul.f32 %v797, 1.5
        %v814 = vmul.f32 %v798, 1.5
        %v815 = vmul.f32 %v799, 1.5
        %v816 = vmul.f32 %v800, 1.5
        %v817 = vmul.f32 %v801, 1.5
        %v818 = vmul.f32 %v802, 1.5
        %v819 = vmul.f32 %v803, 1.5
        %v820 = vmul.f32 %v804, 1.5
        %v821 = vmul.f32 %v805, 1.5
        %v822 = vmul.f32 %v806, 1.5
        %v823 = vmul.f32 %v807, 1.5
        %v824 = vmul.f32 %v808, 1.5
        %v825 = vmul.f32 %v809, 1.5
        %v826 = vmul.f32 %v810, 1.5
        %v827 = vround.ne.pseudo %v811
        %v828 = vround.ne.pseudo %v812
        %v829 = vround.ne.pseudo %v813
        %v830 = vround.ne.pseudo %v814
        %v831 = vround.ne.pseudo %v815
        %v832 = vround.ne.pseudo %v816
        %v833 = vround.ne.pseudo %v817
        %v834 = vround.ne.pseudo %v818
        %v835 = vround.ne.pseudo %v819
        %v836 = vround.ne.pseudo %v820
        %v837 = vround.ne.pseudo %v821
        %v838 = vround.ne.pseudo %v822
        %v839 = vround.ne.pseudo %v823
        %v840 = vround.ne.pseudo %v824
        %v841 = vround.ne.pseudo %v825
        %v842 = vround.ne.pseudo %v826
        %v843 = vmul.f32 %v827, 0.6666667
        %v844 = vmul.f32 %v828, 0.6666667
        %v845 = vmul.f32 %v829, 0.6666667
        %v846 = vmul.f32 %v830, 0.6666667
        %v847 = vmul.f32 %v831, 0.6666667
        %v848 = vmul.f32 %v832, 0.6666667
        %v849 = vmul.f32 %v833, 0.6666667
        %v850 = vmul.f32 %v834, 0.6666667
        %v851 = vmul.f32 %v835, 0.6666667
        %v852 = vmul.f32 %v836, 0.6666667
        %v853 = vmul.f32 %v837, 0.6666667
        %v854 = vmul.f32 %v838, 0.6666667
        %v855 = vmul.f32 %v839, 0.6666667
        %v856 = vmul.f32 %v840, 0.6666667
        %v857 = vmul.f32 %v841, 0.6666667
        %v858 = vmul.f32 %v842, 0.6666667
        %859 = vst [vmem:[#allocation3] sm:$0x1] 0.0
        %860 = vst [vmem:[#allocation3 + $0x40] sm:$0x1] 0.0
        %861 = vst [vmem:[#allocation3 + $0x80] sm:$0x1] 0.0
        %862 = vst [vmem:[#allocation3 + $0xc0] sm:$0x1] 0.0
        %863 = vst [vmem:[#allocation3 + $0x100] sm:$0x1] 0.0
        %864 = vst [vmem:[#allocation3 + $0x140] sm:$0x1] 0.0
        %865 = vst [vmem:[#allocation3 + $0x180] sm:$0x1] 0.0
        %866 = vst [vmem:[#allocation3 + $0x1c0] sm:$0x1] 0.0
        %v883 = vrot.slane %v843, 7
        %v884 = vrot.slane %v844, 7
        %v885 = vsel %vm317, %v883, %v884
        %v886 = vrot.slane %v845, 7
        %v887 = vrot.slane %v846, 7
        %v888 = vsel %vm317, %v886, %v887
        %v889 = vrot.slane %v847, 7
        %v890 = vrot.slane %v848, 7
        %v891 = vsel %vm317, %v889, %v890
        %v892 = vrot.slane %v849, 7
        %v893 = vrot.slane %v850, 7
        %v894 = vsel %vm317, %v892, %v893
        %v895 = vrot.slane %v851, 7
        %v896 = vrot.slane %v852, 7
        %v897 = vsel %vm317, %v895, %v896
        %v898 = vrot.slane %v853, 7
        %v899 = vrot.slane %v854, 7
        %v900 = vsel %vm317, %v898, %v899
        %v901 = vrot.slane %v855, 7
        %v902 = vrot.slane %v856, 7
        %v903 = vsel %vm317, %v901, %v902
        %v904 = vrot.slane %v857, 7
        %v905 = vrot.slane %v858, 7
        %v906 = vsel %vm317, %v904, %v905
        %923 = vst [vmem:[#allocation3] sm:$0xfe] %v883
        %924 = vst [vmem:[#allocation3 + $0x20] sm:$0xff] %v885
        %925 = vst [vmem:[#allocation3 + $0x40] sm:$0xfe] %v886
        %926 = vst [vmem:[#allocation3 + $0x60] sm:$0xff] %v888
        %927 = vst [vmem:[#allocation3 + $0x80] sm:$0xfe] %v889
        %928 = vst [vmem:[#allocation3 + $0xa0] sm:$0xff] %v891
        %929 = vst [vmem:[#allocation3 + $0xc0] sm:$0xfe] %v892
        %930 = vst [vmem:[#allocation3 + $0xe0] sm:$0xff] %v894
        %931 = vst [vmem:[#allocation3 + $0x100] sm:$0xfe] %v895
        %932 = vst [vmem:[#allocation3 + $0x120] sm:$0xff] %v897
        %933 = vst [vmem:[#allocation3 + $0x140] sm:$0xfe] %v898
        %934 = vst [vmem:[#allocation3 + $0x160] sm:$0xff] %v900
        %935 = vst [vmem:[#allocation3 + $0x180] sm:$0xfe] %v901
        %936 = vst [vmem:[#allocation3 + $0x1a0] sm:$0xff] %v903
        %937 = vst [vmem:[#allocation3 + $0x1c0] sm:$0xfe] %v904
        %938 = vst [vmem:[#allocation3 + $0x1e0] sm:$0xff] %v906
        %939 = vst [vmem:[#allocation3 + $0x8] sm:$0xff] %v843
        %940 = vst [vmem:[#allocation3 + $0x28] sm:$0xff] %v844
        %941 = vst [vmem:[#allocation3 + $0x48] sm:$0xff] %v845
        %942 = vst [vmem:[#allocation3 + $0x68] sm:$0xff] %v846
        %943 = vst [vmem:[#allocation3 + $0x88] sm:$0xff] %v847
        %944 = vst [vmem:[#allocation3 + $0xa8] sm:$0xff] %v848
        %945 = vst [vmem:[#allocation3 + $0xc8] sm:$0xff] %v849
        %946 = vst [vmem:[#allocation3 + $0xe8] sm:$0xff] %v850
        %947 = vst [vmem:[#allocation3 + $0x108] sm:$0xff] %v851
        %948 = vst [vmem:[#allocation3 + $0x128] sm:$0xff] %v852
        %949 = vst [vmem:[#allocation3 + $0x148] sm:$0xff] %v853
        %950 = vst [vmem:[#allocation3 + $0x168] sm:$0xff] %v854
        %951 = vst [vmem:[#allocation3 + $0x188] sm:$0xff] %v855
        %952 = vst [vmem:[#allocation3 + $0x1a8] sm:$0xff] %v856
        %953 = vst [vmem:[#allocation3 + $0x1c8] sm:$0xff] %v857
        %954 = vst [vmem:[#allocation3 + $0x1e8] sm:$0xff] %v858
        %v955 = vrot.slane %v843, 1
        %v956 = vrot.slane %v844, 1
        %v957 = vsel %vm441, %v955, %v956
        %v958 = vrot.slane %v845, 1
        %v959 = vrot.slane %v846, 1
        %v960 = vsel %vm441, %v958, %v959
        %v961 = vrot.slane %v847, 1
        %v962 = vrot.slane %v848, 1
        %v963 = vsel %vm441, %v961, %v962
        %v964 = vrot.slane %v849, 1
        %v965 = vrot.slane %v850, 1
        %v966 = vsel %vm441, %v964, %v965
        %v967 = vrot.slane %v851, 1
        %v968 = vrot.slane %v852, 1
        %v969 = vsel %vm441, %v967, %v968
        %v970 = vrot.slane %v853, 1
        %v971 = vrot.slane %v854, 1
        %v972 = vsel %vm441, %v970, %v971
        %v973 = vrot.slane %v855, 1
        %v974 = vrot.slane %v856, 1
        %v975 = vsel %vm441, %v973, %v974
        %v976 = vrot.slane %v857, 1
        %v977 = vrot.slane %v858, 1
        %v978 = vsel %vm441, %v976, %v977
        %995 = vst [vmem:[#allocation3 + $0x10] sm:$0xff] %v957
        %996 = vst [vmem:[#allocation3 + $0x30] sm:$0x7f] %v956
        %997 = vst [vmem:[#allocation3 + $0x50] sm:$0xff] %v960
        %998 = vst [vmem:[#allocation3 + $0x70] sm:$0x7f] %v959
        %999 = vst [vmem:[#allocation3 + $0x90] sm:$0xff] %v963
        %1000 = vst [vmem:[#allocation3 + $0xb0] sm:$0x7f] %v962
        %1001 = vst [vmem:[#allocation3 + $0xd0] sm:$0xff] %v966
        %1002 = vst [vmem:[#allocation3 + $0xf0] sm:$0x7f] %v965
        %1003 = vst [vmem:[#allocation3 + $0x110] sm:$0xff] %v969
        %1004 = vst [vmem:[#allocation3 + $0x130] sm:$0x7f] %v968
        %1005 = vst [vmem:[#allocation3 + $0x150] sm:$0xff] %v972
        %1006 = vst [vmem:[#allocation3 + $0x170] sm:$0x7f] %v971
        %1007 = vst [vmem:[#allocation3 + $0x190] sm:$0xff] %v975
        %1008 = vst [vmem:[#allocation3 + $0x1b0] sm:$0x7f] %v974
        %1009 = vst [vmem:[#allocation3 + $0x1d0] sm:$0xff] %v978
        %1010 = vst [vmem:[#allocation3 + $0x1f0] sm:$0x7f] %v977
        %1011 = vst [vmem:[#allocation3 + $0x37] sm:$0x1] 0.0
        %1012 = vst [vmem:[#allocation3 + $0x77] sm:$0x1] 0.0
        %1013 = vst [vmem:[#allocation3 + $0xb7] sm:$0x1] 0.0
        %1014 = vst [vmem:[#allocation3 + $0xf7] sm:$0x1] 0.0
        %1015 = vst [vmem:[#allocation3 + $0x137] sm:$0x1] 0.0
        %1016 = vst [vmem:[#allocation3 + $0x177] sm:$0x1] 0.0
        %1017 = vst [vmem:[#allocation3 + $0x1b7] sm:$0x1] 0.0
        %1018 = vst [vmem:[#allocation3 + $0x1f7] sm:$0x1] 0.0
        %1019 = vst.msk [vmem:[#allocation3 + $0x18] sm:$0xff] %vm360, %v276
        %1020 = vst.msk [vmem:[#allocation3 + $0x38] sm:$0xff] %vm360, %v277
        %1021 = vst.msk [vmem:[#allocation3 + $0x58] sm:$0xff] %vm360, %v278
        %1022 = vst.msk [vmem:[#allocation3 + $0x78] sm:$0xff] %vm360, %v279
        %1023 = vst.msk [vmem:[#allocation3 + $0x98] sm:$0xff] %vm360, %v280
        %1024 = vst.msk [vmem:[#allocation3 + $0xb8] sm:$0xff] %vm360, %v281
        %1025 = vst.msk [vmem:[#allocation3 + $0xd8] sm:$0xff] %vm360, %v282
        %1026 = vst.msk [vmem:[#allocation3 + $0xf8] sm:$0xff] %vm360, %v283
        %1027 = vst.msk [vmem:[#allocation3 + $0x118] sm:$0xff] %vm360, %v284
        %1028 = vst.msk [vmem:[#allocation3 + $0x138] sm:$0xff] %vm360, %v285
        %1029 = vst.msk [vmem:[#allocation3 + $0x158] sm:$0xff] %vm360, %v286
        %1030 = vst.msk [vmem:[#allocation3 + $0x178] sm:$0xff] %vm360, %v287
        %1031 = vst.msk [vmem:[#allocation3 + $0x198] sm:$0xff] %vm360, %v288
        %1032 = vst.msk [vmem:[#allocation3 + $0x1b8] sm:$0xff] %vm360, %v289
        %1033 = vst.msk [vmem:[#allocation3 + $0x1d8] sm:$0xff] %vm360, %v290
        %1034 = vst.msk [vmem:[#allocation3 + $0x1f8] sm:$0xff] %vm360, %v291
        %v1035 = vld [vmem:[#allocation3] sm:$0xff]
        %v1036 = vld [vmem:[#allocation3 + $0x8] sm:$0xff]
        %v1037 = vld [vmem:[#allocation3 + $0x10] sm:$0xff]
        %v1038 = vld [vmem:[#allocation3 + $0x18] sm:$0xff]
        %v1039 = vld [vmem:[#allocation3 + $0x20] sm:$0xff]
        %v1040 = vld [vmem:[#allocation3 + $0x28] sm:$0xff]
        %v1041 = vld [vmem:[#allocation3 + $0x30] sm:$0xff]
        %v1042 = vld [vmem:[#allocation3 + $0x38] sm:$0xff]
        %v1043 = vld [vmem:[#allocation3 + $0x40] sm:$0xff]
        %v1044 = vld [vmem:[#allocation3 + $0x48] sm:$0xff]
        %v1045 = vld [vmem:[#allocation3 + $0x50] sm:$0xff]
        %v1046 = vld [vmem:[#allocation3 + $0x58] sm:$0xff]
        %v1047 = vld [vmem:[#allocation3 + $0x60] sm:$0xff]
        %v1048 = vld [vmem:[#allocation3 + $0x68] sm:$0xff]
        %v1049 = vld [vmem:[#allocation3 + $0x70] sm:$0xff]
        %v1050 = vld [vmem:[#allocation3 + $0x78] sm:$0xff]
        %v1051 = vld [vmem:[#allocation3 + $0x80] sm:$0xff]
        %v1052 = vld [vmem:[#allocation3 + $0x88] sm:$0xff]
        %v1053 = vld [vmem:[#allocation3 + $0x90] sm:$0xff]
        %v1054 = vld [vmem:[#allocation3 + $0x98] sm:$0xff]
        %v1055 = vld [vmem:[#allocation3 + $0xa0] sm:$0xff]
        %v1056 = vld [vmem:[#allocation3 + $0xa8] sm:$0xff]
        %v1057 = vld [vmem:[#allocation3 + $0xb0] sm:$0xff]
        %v1058 = vld [vmem:[#allocation3 + $0xb8] sm:$0xff]
        %v1059 = vld [vmem:[#allocation3 + $0xc0] sm:$0xff]
        %v1060 = vld [vmem:[#allocation3 + $0xc8] sm:$0xff]
        %v1061 = vld [vmem:[#allocation3 + $0xd0] sm:$0xff]
        %v1062 = vld [vmem:[#allocation3 + $0xd8] sm:$0xff]
        %v1063 = vld [vmem:[#allocation3 + $0xe0] sm:$0xff]
        %v1064 = vld [vmem:[#allocation3 + $0xe8] sm:$0xff]
        %v1065 = vld [vmem:[#allocation3 + $0xf0] sm:$0xff]
        %v1066 = vld [vmem:[#allocation3 + $0xf8] sm:$0xff]
        %v1067 = vld [vmem:[#allocation3 + $0x100] sm:$0xff]
        %v1068 = vld [vmem:[#allocation3 + $0x108] sm:$0xff]
        %v1069 = vld [vmem:[#allocation3 + $0x110] sm:$0xff]
        %v1070 = vld [vmem:[#allocation3 + $0x118] sm:$0xff]
        %v1071 = vld [vmem:[#allocation3 + $0x120] sm:$0xff]
        %v1072 = vld [vmem:[#allocation3 + $0x128] sm:$0xff]
        %v1073 = vld [vmem:[#allocation3 + $0x130] sm:$0xff]
        %v1074 = vld [vmem:[#allocation3 + $0x138] sm:$0xff]
        %v1075 = vld [vmem:[#allocation3 + $0x140] sm:$0xff]
        %v1076 = vld [vmem:[#allocation3 + $0x148] sm:$0xff]
        %v1077 = vld [vmem:[#allocation3 + $0x150] sm:$0xff]
        %v1078 = vld [vmem:[#allocation3 + $0x158] sm:$0xff]
        %v1079 = vld [vmem:[#allocation3 + $0x160] sm:$0xff]
        %v1080 = vld [vmem:[#allocation3 + $0x168] sm:$0xff]
        %v1081 = vld [vmem:[#allocation3 + $0x170] sm:$0xff]
        %v1082 = vld [vmem:[#allocation3 + $0x178] sm:$0xff]
        %v1083 = vld [vmem:[#allocation3 + $0x180] sm:$0xff]
        %v1084 = vld [vmem:[#allocation3 + $0x188] sm:$0xff]
        %v1085 = vld [vmem:[#allocation3 + $0x190] sm:$0xff]
        %v1086 = vld [vmem:[#allocation3 + $0x198] sm:$0xff]
        %v1087 = vld [vmem:[#allocation3 + $0x1a0] sm:$0xff]
        %v1088 = vld [vmem:[#allocation3 + $0x1a8] sm:$0xff]
        %v1089 = vld [vmem:[#allocation3 + $0x1b0] sm:$0xff]
        %v1090 = vld [vmem:[#allocation3 + $0x1b8] sm:$0xff]
        %v1091 = vld [vmem:[#allocation3 + $0x1c0] sm:$0xff]
        %v1092 = vld [vmem:[#allocation3 + $0x1c8] sm:$0xff]
        %v1093 = vld [vmem:[#allocation3 + $0x1d0] sm:$0xff]
        %v1094 = vld [vmem:[#allocation3 + $0x1d8] sm:$0xff]
        %v1095 = vld [vmem:[#allocation3 + $0x1e0] sm:$0xff]
        %v1096 = vld [vmem:[#allocation3 + $0x1e8] sm:$0xff]
        %v1097 = vld [vmem:[#allocation3 + $0x1f0] sm:$0xff]
        %v1098 = vld [vmem:[#allocation3 + $0x1f8] sm:$0xff]
        %v1099 = vpack.c.bf16 %v1039, %v1035
        %v1100 = vpack.c.bf16 %v1040, %v1036
        %v1101 = vpack.c.bf16 %v1041, %v1037
        %v1102 = vpack.c.bf16 %v1042, %v1038
        %v1103 = vpack.c.bf16 %v1047, %v1043
        %v1104 = vpack.c.bf16 %v1048, %v1044
        %v1105 = vpack.c.bf16 %v1049, %v1045
        %v1106 = vpack.c.bf16 %v1050, %v1046
        %v1107 = vpack.c.bf16 %v1055, %v1051
        %v1108 = vpack.c.bf16 %v1056, %v1052
        %v1109 = vpack.c.bf16 %v1057, %v1053
        %v1110 = vpack.c.bf16 %v1058, %v1054
        %v1111 = vpack.c.bf16 %v1063, %v1059
        %v1112 = vpack.c.bf16 %v1064, %v1060
        %v1113 = vpack.c.bf16 %v1065, %v1061
        %v1114 = vpack.c.bf16 %v1066, %v1062
        %v1115 = vpack.c.bf16 %v1071, %v1067
        %v1116 = vpack.c.bf16 %v1072, %v1068
        %v1117 = vpack.c.bf16 %v1073, %v1069
        %v1118 = vpack.c.bf16 %v1074, %v1070
        %v1119 = vpack.c.bf16 %v1079, %v1075
        %v1120 = vpack.c.bf16 %v1080, %v1076
        %v1121 = vpack.c.bf16 %v1081, %v1077
        %v1122 = vpack.c.bf16 %v1082, %v1078
        %v1123 = vpack.c.bf16 %v1087, %v1083
        %v1124 = vpack.c.bf16 %v1088, %v1084
        %v1125 = vpack.c.bf16 %v1089, %v1085
        %v1126 = vpack.c.bf16 %v1090, %v1086
        %v1127 = vpack.c.bf16 %v1095, %v1091
        %v1128 = vpack.c.bf16 %v1096, %v1092
        %v1129 = vpack.c.bf16 %v1097, %v1093
        %v1130 = vpack.c.bf16 %v1098, %v1094
        %v1131 = vld [vmem:[#allocation9] sm:$0xf]
        %v1132 = vld [vmem:[#allocation9 + $0x4] sm:$0xf]
        %v1133 = vld [vmem:[#allocation9 + $0x8] sm:$0xf]
        %v1134 = vld [vmem:[#allocation9 + $0xc] sm:$0xf]
        %v1135 = vld [vmem:[#allocation9 + $0x10] sm:$0xf]
        %v1136 = vld [vmem:[#allocation9 + $0x14] sm:$0xf]
        %v1137 = vld [vmem:[#allocation9 + $0x18] sm:$0xf]
        %v1138 = vld [vmem:[#allocation9 + $0x1c] sm:$0xf]
        %v1139 = vld [vmem:[#allocation9 + $0x20] sm:$0xf]
        %v1140 = vld [vmem:[#allocation9 + $0x24] sm:$0xf]
        %v1141 = vld [vmem:[#allocation9 + $0x28] sm:$0xf]
        %v1142 = vld [vmem:[#allocation9 + $0x2c] sm:$0xf]
        %v1143 = vld [vmem:[#allocation9 + $0x30] sm:$0xf]
        %v1144 = vld [vmem:[#allocation9 + $0x34] sm:$0xf]
        %v1145 = vld [vmem:[#allocation9 + $0x38] sm:$0xf]
        %v1146 = vld [vmem:[#allocation9 + $0x3c] sm:$0xf]
        %v1147 = vld [vmem:[#allocation9 + $0x40] sm:$0xf]
        %v1148 = vld [vmem:[#allocation9 + $0x44] sm:$0xf]
        %v1149 = vld [vmem:[#allocation9 + $0x48] sm:$0xf]
        %v1150 = vld [vmem:[#allocation9 + $0x4c] sm:$0xf]
        %v1151 = vld [vmem:[#allocation9 + $0x50] sm:$0xf]
        %v1152 = vld [vmem:[#allocation9 + $0x54] sm:$0xf]
        %v1153 = vld [vmem:[#allocation9 + $0x58] sm:$0xf]
        %v1154 = vld [vmem:[#allocation9 + $0x5c] sm:$0xf]
        %v1155 = vld [vmem:[#allocation9 + $0x60] sm:$0xf]
        %v1156 = vld [vmem:[#allocation9 + $0x64] sm:$0xf]
        %v1157 = vld [vmem:[#allocation9 + $0x68] sm:$0xf]
        %v1158 = vld [vmem:[#allocation9 + $0x6c] sm:$0xf]
        %v1159 = vld [vmem:[#allocation9 + $0x70] sm:$0xf]
        %v1160 = vld [vmem:[#allocation9 + $0x74] sm:$0xf]
        %v1161 = vld [vmem:[#allocation9 + $0x78] sm:$0xf]
        %v1162 = vld [vmem:[#allocation9 + $0x7c] sm:$0xf]
        %v1163 = vld [vmem:[#allocation9 + $0x80] sm:$0xf]
        %v1164 = vld [vmem:[#allocation9 + $0x84] sm:$0xf]
        %v1165 = vld [vmem:[#allocation9 + $0x88] sm:$0xf]
        %v1166 = vld [vmem:[#allocation9 + $0x8c] sm:$0xf]
        %v1167 = vld [vmem:[#allocation9 + $0x90] sm:$0xf]
        %v1168 = vld [vmem:[#allocation9 + $0x94] sm:$0xf]
        %v1169 = vld [vmem:[#allocation9 + $0x98] sm:$0xf]
        %v1170 = vld [vmem:[#allocation9 + $0x9c] sm:$0xf]
        %v1171 = vld [vmem:[#allocation9 + $0xa0] sm:$0xf]
        %v1172 = vld [vmem:[#allocation9 + $0xa4] sm:$0xf]
        %v1173 = vld [vmem:[#allocation9 + $0xa8] sm:$0xf]
        %v1174 = vld [vmem:[#allocation9 + $0xac] sm:$0xf]
        %v1175 = vld [vmem:[#allocation9 + $0xb0] sm:$0xf]
        %v1176 = vld [vmem:[#allocation9 + $0xb4] sm:$0xf]
        %v1177 = vld [vmem:[#allocation9 + $0xb8] sm:$0xf]
        %v1178 = vld [vmem:[#allocation9 + $0xbc] sm:$0xf]
        %v1179 = vld [vmem:[#allocation9 + $0xc0] sm:$0xf]
        %v1180 = vld [vmem:[#allocation9 + $0xc4] sm:$0xf]
        %v1181 = vld [vmem:[#allocation9 + $0xc8] sm:$0xf]
        %v1182 = vld [vmem:[#allocation9 + $0xcc] sm:$0xf]
        %v1183 = vld [vmem:[#allocation9 + $0xd0] sm:$0xf]
        %v1184 = vld [vmem:[#allocation9 + $0xd4] sm:$0xf]
        %v1185 = vld [vmem:[#allocation9 + $0xd8] sm:$0xf]
        %v1186 = vld [vmem:[#allocation9 + $0xdc] sm:$0xf]
        %v1187 = vld [vmem:[%s4] sm:$0x1]
        %v1189 = vlaneseq
        %v1190 = vshrl.u32 %v1189, 7
        %v1191 = vsub.s32 0, %v1190
        %v1192 = vrot.slane %v1187, %v1191
        %v1250 = vunpack.c.l.b16 %v1131
        %v1251 = vunpack.c.l.b16 %v1132
        %v1252 = vunpack.c.l.b16 %v1133
        %v1253 = vunpack.c.l.b16 %v1134
        %v1254 = vunpack.c.l.b16 %v1135
        %v1255 = vunpack.c.l.b16 %v1136
        %v1256 = vunpack.c.l.b16 %v1137
        %v1257 = vunpack.c.l.b16 %v1138
        %v1258 = vunpack.c.l.b16 %v1139
        %v1259 = vunpack.c.l.b16 %v1140
        %v1260 = vunpack.c.l.b16 %v1141
        %v1261 = vunpack.c.l.b16 %v1142
        %v1262 = vunpack.c.l.b16 %v1143
        %v1263 = vunpack.c.l.b16 %v1144
        %v1264 = vunpack.c.l.b16 %v1145
        %v1265 = vunpack.c.l.b16 %v1146
        %v1266 = vunpack.c.l.b16 %v1147
        %v1267 = vunpack.c.l.b16 %v1148
        %v1268 = vunpack.c.l.b16 %v1149
        %v1269 = vunpack.c.l.b16 %v1150
        %v1270 = vunpack.c.l.b16 %v1151
        %v1271 = vunpack.c.l.b16 %v1152
        %v1272 = vunpack.c.l.b16 %v1153
        %v1273 = vunpack.c.l.b16 %v1154
        %v1274 = vunpack.c.l.b16 %v1155
        %v1275 = vunpack.c.l.b16 %v1156
        %v1276 = vunpack.c.l.b16 %v1157
        %v1277 = vunpack.c.l.b16 %v1158
        %v1278 = vunpack.c.l.b16 %v1159
        %v1279 = vunpack.c.l.b16 %v1160
        %v1280 = vunpack.c.l.b16 %v1161
        %v1281 = vunpack.c.l.b16 %v1162
        %v1282 = vunpack.c.l.b16 %v1163
        %v1283 = vunpack.c.l.b16 %v1164
        %v1284 = vunpack.c.l.b16 %v1165
        %v1285 = vunpack.c.l.b16 %v1166
        %v1286 = vunpack.c.l.b16 %v1167
        %v1287 = vunpack.c.l.b16 %v1168
        %v1288 = vunpack.c.l.b16 %v1169
        %v1289 = vunpack.c.l.b16 %v1170
        %v1290 = vunpack.c.l.b16 %v1171
        %v1291 = vunpack.c.l.b16 %v1172
        %v1292 = vunpack.c.l.b16 %v1173
        %v1293 = vunpack.c.l.b16 %v1174
        %v1294 = vunpack.c.l.b16 %v1175
        %v1295 = vunpack.c.l.b16 %v1176
        %v1296 = vunpack.c.l.b16 %v1177
        %v1297 = vunpack.c.l.b16 %v1178
        %v1298 = vunpack.c.l.b16 %v1179
        %v1299 = vunpack.c.l.b16 %v1180
        %v1300 = vunpack.c.l.b16 %v1181
        %v1301 = vunpack.c.l.b16 %v1182
        %v1302 = vunpack.c.l.b16 %v1183
        %v1303 = vunpack.c.l.b16 %v1184
        %v1304 = vunpack.c.l.b16 %v1185
        %v1305 = vunpack.c.l.b16 %v1186
        %v1306 = vpack.c.b16 %v1251, %v1250
        %v1307 = vpack.c.b16 %v1253, %v1252
        %v1308 = vpack.c.b16 %v1255, %v1254
        %v1309 = vpack.c.b16 %v1257, %v1256
        %v1310 = vpack.c.b16 %v1259, %v1258
        %v1311 = vpack.c.b16 %v1261, %v1260
        %v1312 = vpack.c.b16 %v1263, %v1262
        %v1313 = vpack.c.b16 %v1265, %v1264
        %v1314 = vpack.c.b16 %v1267, %v1266
        %v1315 = vpack.c.b16 %v1269, %v1268
        %v1316 = vpack.c.b16 %v1271, %v1270
        %v1317 = vpack.c.b16 %v1273, %v1272
        %v1318 = vpack.c.b16 %v1275, %v1274
        %v1319 = vpack.c.b16 %v1277, %v1276
        %v1320 = vpack.c.b16 %v1279, %v1278
        %v1321 = vpack.c.b16 %v1281, %v1280
        %v1322 = vpack.c.b16 %v1283, %v1282
        %v1323 = vpack.c.b16 %v1285, %v1284
        %v1324 = vpack.c.b16 %v1287, %v1286
        %v1325 = vpack.c.b16 %v1289, %v1288
        %v1326 = vpack.c.b16 %v1291, %v1290
        %v1327 = vpack.c.b16 %v1293, %v1292
        %v1328 = vpack.c.b16 %v1295, %v1294
        %v1329 = vpack.c.b16 %v1297, %v1296
        %v1330 = vpack.c.b16 %v1299, %v1298
        %v1331 = vpack.c.b16 %v1301, %v1300
        %v1332 = vpack.c.b16 %v1303, %v1302
        %v1333 = vpack.c.b16 %v1305, %v1304
        %v1363 = vsel %vm360, %v1102, 0
        %v1366 = vsel %vm360, %v1106, 0
        %v1369 = vsel %vm360, %v1110, 0
        %v1372 = vsel %vm360, %v1114, 0
        %v1375 = vsel %vm360, %v1118, 0
        %v1378 = vsel %vm360, %v1122, 0
        %v1381 = vsel %vm360, %v1126, 0
        %v1384 = vsel %vm360, %v1130, 0
        %1386 = vmatprep.subr.bf16.mxu0 0
        %1387 = vmatpush1.bf16.msra.mxu0 %v1306
        %1388 = vmatprep.subr.bf16.mxu0 0
        %1389 = vmatpush1.bf16.msra.mxu0 %v1307
        %1390 = vmatprep.subr.bf16.mxu0 0
        %1391 = vmatpush1.bf16.msra.mxu0 %v1308
        %1392 = vmatprep.subr.bf16.mxu0 0
        %1393 = vmatpush1.bf16.msra.mxu0 %v1309
        %1394 = vmatprep.subr.bf16.mxu0 0
        %1395 = vmatpush1.bf16.msra.mxu0 %v1310
        %1396 = vmatprep.subr.bf16.mxu0 0
        %1397 = vmatpush1.bf16.msra.mxu0 %v1311
        %1398 = vmatprep.subr.bf16.mxu0 0
        %1399 = vmatpush1.bf16.msra.mxu0 %v1312
        %1400 = vmatprep.subr.bf16.mxu0 0
        %1401 = vmatpush1.bf16.msra.mxu0 %v1313
        %1402 = vmatprep.subr.bf16.mxu0 0
        %1403 = vmatpush1.bf16.msra.mxu0 %v1314
        %1404 = vmatprep.subr.bf16.mxu0 0
        %1405 = vmatpush1.bf16.msra.mxu0 %v1315
        %1406 = vmatprep.subr.bf16.mxu0 0
        %1407 = vmatpush1.bf16.msra.mxu0 %v1316
        %1408 = vmatprep.subr.bf16.mxu0 0
        %1409 = vmatpush1.bf16.msra.mxu0 %v1317
        %1410 = vmatprep.subr.bf16.mxu0 0
        %1411 = vmatpush1.bf16.msra.mxu0 %v1318
        %1412 = vmatprep.subr.bf16.mxu0 0
        %1413 = vmatpush1.bf16.msra.mxu0 %v1319
        %1414 = vmatprep.subr.bf16.mxu0 0
        %1415 = vmatpush1.bf16.msra.mxu0 %v1320
        %1416 = vmatprep.subr.bf16.mxu0 0
        %1417 = vmatpush1.bf16.msra.mxu0 %v1321
        %1418 = vmatprep.mubr.bf16.mxu0 %v1100
        %1419 = vmatmul.mubr.bf16.gmra.mrb[0].mxu0 %v1099
        %v1420 = vpop.f32.mrb[0].mxu0
        %v1421 = vadd.f32 %v1192, %v1420
        %v1422 = vpop.f32.mrb[0].mxu0
        %v1423 = vpop.f32.mrb[0].mxu0
        %v1424 = vadd.f32 %v1192, %v1423
        %v1425 = vpop.f32.mrb[0].mxu0
        %1426 = vmatprep.mubr.bf16.mxu0 %v1104
        %1427 = vmatmul.mubr.bf16.gmra.mrb[0].mxu0 %v1103
        %v1428 = vpop.f32.mrb[0].mxu0
        %v1429 = vadd.f32 %v1192, %v1428
        %v1430 = vpop.f32.mrb[0].mxu0
        %v1431 = vpop.f32.mrb[0].mxu0
        %v1432 = vadd.f32 %v1192, %v1431
        %v1433 = vpop.f32.mrb[0].mxu0
        %1434 = vmatprep.mubr.bf16.mxu0 %v1108
        %1435 = vmatmul.mubr.bf16.gmra.mrb[0].mxu0 %v1107
        %v1436 = vpop.f32.mrb[0].mxu0
        %v1437 = vadd.f32 %v1192, %v1436
        %v1438 = vpop.f32.mrb[0].mxu0
        %v1439 = vpop.f32.mrb[0].mxu0
        %v1440 = vadd.f32 %v1192, %v1439
        %v1441 = vpop.f32.mrb[0].mxu0
        %1442 = vmatprep.mubr.bf16.mxu0 %v1112
        %1443 = vmatmul.mubr.bf16.gmra.mrb[0].mxu0 %v1111
        %v1444 = vpop.f32.mrb[0].mxu0
        %v1445 = vadd.f32 %v1192, %v1444
        %v1446 = vpop.f32.mrb[0].mxu0
        %v1447 = vpop.f32.mrb[0].mxu0
        %v1448 = vadd.f32 %v1192, %v1447
        %v1449 = vpop.f32.mrb[0].mxu0
        %1450 = vmatprep.mubr.bf16.mxu0 %v1116
        %1451 = vmatmul.mubr.bf16.gmra.mrb[0].mxu0 %v1115
        %v1452 = vpop.f32.mrb[0].mxu0
        %v1453 = vadd.f32 %v1192, %v1452
        %v1454 = vpop.f32.mrb[0].mxu0
        %v1455 = vpop.f32.mrb[0].mxu0
        %v1456 = vadd.f32 %v1192, %v1455
        %v1457 = vpop.f32.mrb[0].mxu0
        %1458 = vmatprep.mubr.bf16.mxu0 %v1120
        %1459 = vmatmul.mubr.bf16.gmra.mrb[0].mxu0 %v1119
        %v1460 = vpop.f32.mrb[0].mxu0
        %v1461 = vadd.f32 %v1192, %v1460
        %v1462 = vpop.f32.mrb[0].mxu0
        %v1463 = vpop.f32.mrb[0].mxu0
        %v1464 = vadd.f32 %v1192, %v1463
        %v1465 = vpop.f32.mrb[0].mxu0
        %1466 = vmatprep.mubr.bf16.mxu0 %v1124
        %1467 = vmatmul.mubr.bf16.gmra.mrb[0].mxu0 %v1123
        %v1468 = vpop.f32.mrb[0].mxu0
        %v1469 = vadd.f32 %v1192, %v1468
        %v1470 = vpop.f32.mrb[0].mxu0
        %v1471 = vpop.f32.mrb[0].mxu0
        %v1472 = vadd.f32 %v1192, %v1471
        %v1473 = vpop.f32.mrb[0].mxu0
        %1474 = vmatprep.mubr.bf16.mxu0 %v1128
        %1475 = vmatmul.mubr.bf16.gmra.mrb[0].mxu0 %v1127
        %v1476 = vpop.f32.mrb[0].mxu0
        %v1477 = vadd.f32 %v1192, %v1476
        %v1478 = vpop.f32.mrb[0].mxu0
        %v1479 = vpop.f32.mrb[0].mxu0
        %v1480 = vadd.f32 %v1192, %v1479
        %v1481 = vpop.f32.mrb[0].mxu0
        %1482 = vdwg.mxu0
        %1483 = vmatprep.subr.bf16.mxu0 0
        %1484 = vmatpush1.bf16.msra.mxu0 %v1322
        %1485 = vmatprep.subr.bf16.mxu0 0
        %1486 = vmatpush1.bf16.msra.mxu0 %v1323
        %1487 = vmatprep.subr.bf16.mxu0 0
        %1488 = vmatpush1.bf16.msra.mxu0 %v1324
        %1489 = vmatprep.subr.bf16.mxu0 0
        %1490 = vmatpush1.bf16.msra.mxu0 %v1325
        %1491 = vmatprep.subr.bf16.mxu0 0
        %1492 = vmatpush1.bf16.msra.mxu0 %v1326
        %1493 = vmatprep.subr.bf16.mxu0 0
        %1494 = vmatpush1.bf16.msra.mxu0 %v1327
        %1495 = vmatprep.subr.bf16.mxu0 0
        %1496 = vmatpush1.bf16.msra.mxu0 %v1328
        %1497 = vmatprep.subr.bf16.mxu0 0
        %1498 = vmatpush1.bf16.msra.mxu0 %v1329
        %1499 = vmatprep.subr.bf16.mxu0 0
        %1500 = vmatpush1.bf16.msra.mxu0 %v1330
        %1501 = vmatprep.subr.bf16.mxu0 0
        %1502 = vmatpush1.bf16.msra.mxu0 %v1331
        %1503 = vmatprep.subr.bf16.mxu0 0
        %1504 = vmatpush1.bf16.msra.mxu0 %v1332
        %1505 = vmatprep.subr.bf16.mxu0 0
        %1506 = vmatpush1.bf16.msra.mxu0 %v1333
        %1507 = vmatprep.subr.bf16.mxu0 0
        %1508 = vmatpush1.bf16.msra.mxu0 0
        %1509 = vmatprep.subr.bf16.mxu0 0
        %1510 = vmatpush1.bf16.msra.mxu0 0
        %1511 = vmatprep.subr.bf16.mxu0 0
        %1512 = vmatpush1.bf16.msra.mxu0 0
        %1513 = vmatprep.subr.bf16.mxu0 0
        %1514 = vmatpush1.bf16.msra.mxu0 0
        %1515 = vmatprep.mubr.bf16.mxu0 %v1363
        %1516 = vmatmul.mubr.bf16.gmra.mrb[0].mxu0 %v1101
        %v1517 = vpop.f32.mrb[0].mxu0
        %v1518 = vadd.f32 %v1421, %v1517
        %v1519 = vpop.f32.mrb[0].mxu0
        %v1520 = vpop.f32.mrb[0].mxu0
        %v1521 = vadd.f32 %v1424, %v1520
        %v1522 = vpop.f32.mrb[0].mxu0
        %1523 = vmatprep.mubr.bf16.mxu0 %v1366
        %1524 = vmatmul.mubr.bf16.gmra.mrb[0].mxu0 %v1105
        %v1525 = vpop.f32.mrb[0].mxu0
        %v1526 = vadd.f32 %v1429, %v1525
        %v1527 = vpop.f32.mrb[0].mxu0
        %v1528 = vpop.f32.mrb[0].mxu0
        %v1529 = vadd.f32 %v1432, %v1528
        %v1530 = vpop.f32.mrb[0].mxu0
        %1531 = vmatprep.mubr.bf16.mxu0 %v1369
        %1532 = vmatmul.mubr.bf16.gmra.mrb[0].mxu0 %v1109
        %v1533 = vpop.f32.mrb[0].mxu0
        %v1534 = vadd.f32 %v1437, %v1533
        %v1535 = vpop.f32.mrb[0].mxu0
        %v1536 = vpop.f32.mrb[0].mxu0
        %v1537 = vadd.f32 %v1440, %v1536
        %v1538 = vpop.f32.mrb[0].mxu0
        %1539 = vmatprep.mubr.bf16.mxu0 %v1372
        %1540 = vmatmul.mubr.bf16.gmra.mrb[0].mxu0 %v1113
        %v1541 = vpop.f32.mrb[0].mxu0
        %v1542 = vadd.f32 %v1445, %v1541
        %v1543 = vpop.f32.mrb[0].mxu0
        %v1544 = vpop.f32.mrb[0].mxu0
        %v1545 = vadd.f32 %v1448, %v1544
        %v1546 = vpop.f32.mrb[0].mxu0
        %1547 = vmatprep.mubr.bf16.mxu0 %v1375
        %1548 = vmatmul.mubr.bf16.gmra.mrb[0].mxu0 %v1117
        %v1549 = vpop.f32.mrb[0].mxu0
        %v1550 = vadd.f32 %v1453, %v1549
        %v1551 = vpop.f32.mrb[0].mxu0
        %v1552 = vpop.f32.mrb[0].mxu0
        %v1553 = vadd.f32 %v1456, %v1552
        %v1554 = vpop.f32.mrb[0].mxu0
        %1555 = vmatprep.mubr.bf16.mxu0 %v1378
        %1556 = vmatmul.mubr.bf16.gmra.mrb[0].mxu0 %v1121
        %v1557 = vpop.f32.mrb[0].mxu0
        %v1558 = vadd.f32 %v1461, %v1557
        %v1559 = vpop.f32.mrb[0].mxu0
        %v1560 = vpop.f32.mrb[0].mxu0
        %v1561 = vadd.f32 %v1464, %v1560
        %v1562 = vpop.f32.mrb[0].mxu0
        %1563 = vmatprep.mubr.bf16.mxu0 %v1381
        %1564 = vmatmul.mubr.bf16.gmra.mrb[0].mxu0 %v1125
        %v1565 = vpop.f32.mrb[0].mxu0
        %v1566 = vadd.f32 %v1469, %v1565
        %v1567 = vpop.f32.mrb[0].mxu0
        %v1568 = vpop.f32.mrb[0].mxu0
        %v1569 = vadd.f32 %v1472, %v1568
        %v1570 = vpop.f32.mrb[0].mxu0
        %1571 = vmatprep.mubr.bf16.mxu0 %v1384
        %1572 = vmatmul.mubr.bf16.gmra.mrb[0].mxu0 %v1129
        %v1573 = vpop.f32.mrb[0].mxu0
        %v1574 = vadd.f32 %v1477, %v1573
        %v1575 = vpop.f32.mrb[0].mxu0
        %v1576 = vpop.f32.mrb[0].mxu0
        %v1577 = vadd.f32 %v1480, %v1576
        %v1578 = vpop.f32.mrb[0].mxu0
        %1579 = vdwg.mxu0
        %v1580 = vmax.f32 %v1518, 0.0
        %v1581 = vmax.f32 %v1521, 0.0
        %v1582 = vmax.f32 %v1526, 0.0
        %v1583 = vmax.f32 %v1529, 0.0
        %v1584 = vmax.f32 %v1534, 0.0
        %v1585 = vmax.f32 %v1537, 0.0
        %v1586 = vmax.f32 %v1542, 0.0
        %v1587 = vmax.f32 %v1545, 0.0
        %v1588 = vmax.f32 %v1550, 0.0
        %v1589 = vmax.f32 %v1553, 0.0
        %v1590 = vmax.f32 %v1558, 0.0
        %v1591 = vmax.f32 %v1561, 0.0
        %v1592 = vmax.f32 %v1566, 0.0
        %v1593 = vmax.f32 %v1569, 0.0
        %v1594 = vmax.f32 %v1574, 0.0
        %v1595 = vmax.f32 %v1577, 0.0
        %v1596 = vmin.f32 %v1580, 10.0
        %v1597 = vmin.f32 %v1581, 10.0
        %v1598 = vmin.f32 %v1582, 10.0
        %v1599 = vmin.f32 %v1583, 10.0
        %v1600 = vmin.f32 %v1584, 10.0
        %v1601 = vmin.f32 %v1585, 10.0
        %v1602 = vmin.f32 %v1586, 10.0
        %v1603 = vmin.f32 %v1587, 10.0
        %v1604 = vmin.f32 %v1588, 10.0
        %v1605 = vmin.f32 %v1589, 10.0
        %v1606 = vmin.f32 %v1590, 10.0
        %v1607 = vmin.f32 %v1591, 10.0
        %v1608 = vmin.f32 %v1592, 10.0
        %v1609 = vmin.f32 %v1593, 10.0
        %v1610 = vmin.f32 %v1594, 10.0
        %v1611 = vmin.f32 %v1595, 10.0
        %v1612 = vmul.f32 %v1596, 1.5
        %v1613 = vmul.f32 %v1597, 1.5
        %v1614 = vmul.f32 %v1598, 1.5
        %v1615 = vmul.f32 %v1599, 1.5
        %v1616 = vmul.f32 %v1600, 1.5
        %v1617 = vmul.f32 %v1601, 1.5
        %v1618 = vmul.f32 %v1602, 1.5
        %v1619 = vmul.f32 %v1603, 1.5
        %v1620 = vmul.f32 %v1604, 1.5
        %v1621 = vmul.f32 %v1605, 1.5
        %v1622 = vmul.f32 %v1606, 1.5
        %v1623 = vmul.f32 %v1607, 1.5
        %v1624 = vmul.f32 %v1608, 1.5
        %v1625 = vmul.f32 %v1609, 1.5
        %v1626 = vmul.f32 %v1610, 1.5
        %v1627 = vmul.f32 %v1611, 1.5
        %v1628 = vround.ne.pseudo %v1612
        %v1629 = vround.ne.pseudo %v1613
        %v1630 = vround.ne.pseudo %v1614
        %v1631 = vround.ne.pseudo %v1615
        %v1632 = vround.ne.pseudo %v1616
        %v1633 = vround.ne.pseudo %v1617
        %v1634 = vround.ne.pseudo %v1618
        %v1635 = vround.ne.pseudo %v1619
        %v1636 = vround.ne.pseudo %v1620
        %v1637 = vround.ne.pseudo %v1621
        %v1638 = vround.ne.pseudo %v1622
        %v1639 = vround.ne.pseudo %v1623
        %v1640 = vround.ne.pseudo %v1624
        %v1641 = vround.ne.pseudo %v1625
        %v1642 = vround.ne.pseudo %v1626
        %v1643 = vround.ne.pseudo %v1627
        %v1644 = vmul.f32 %v1628, 0.6666667
        %v1645 = vmul.f32 %v1629, 0.6666667
        %v1646 = vmul.f32 %v1630, 0.6666667
        %v1647 = vmul.f32 %v1631, 0.6666667
        %v1648 = vmul.f32 %v1632, 0.6666667
        %v1649 = vmul.f32 %v1633, 0.6666667
        %v1650 = vmul.f32 %v1634, 0.6666667
        %v1651 = vmul.f32 %v1635, 0.6666667
        %v1652 = vmul.f32 %v1636, 0.6666667
        %v1653 = vmul.f32 %v1637, 0.6666667
        %v1654 = vmul.f32 %v1638, 0.6666667
        %v1655 = vmul.f32 %v1639, 0.6666667
        %v1656 = vmul.f32 %v1640, 0.6666667
        %v1657 = vmul.f32 %v1641, 0.6666667
        %v1658 = vmul.f32 %v1642, 0.6666667
        %v1659 = vmul.f32 %v1643, 0.6666667
        %1660 = vst [vmem:[%s272] sm:$0xff] %v1644
        %1661 = vst [vmem:[%s272 + $0x8] sm:$0xff] %v1645
        %1662 = vst [vmem:[%s272 + $0x10] sm:$0xff] %v1646
        %1663 = vst [vmem:[%s272 + $0x18] sm:$0xff] %v1647
        %1664 = vst [vmem:[%s272 + $0x20] sm:$0xff] %v1648
        %1665 = vst [vmem:[%s272 + $0x28] sm:$0xff] %v1649
        %1666 = vst [vmem:[%s272 + $0x30] sm:$0xff] %v1650
        %1667 = vst [vmem:[%s272 + $0x38] sm:$0xff] %v1651
        %1668 = vst [vmem:[%s272 + $0x40] sm:$0xff] %v1652
        %1669 = vst [vmem:[%s272 + $0x48] sm:$0xff] %v1653
        %1670 = vst [vmem:[%s272 + $0x50] sm:$0xff] %v1654
        %1671 = vst [vmem:[%s272 + $0x58] sm:$0xff] %v1655
        %1672 = vst [vmem:[%s272 + $0x60] sm:$0xff] %v1656
        %1673 = vst [vmem:[%s272 + $0x68] sm:$0xff] %v1657
        %1674 = vst [vmem:[%s272 + $0x70] sm:$0xff] %v1658
        %1675 = vst [vmem:[%s272 + $0x78] sm:$0xff] %v1659
        %s1676 = sand.u32 %s141, 1
        %s1677 = scalar_lea.sflag [#allocation6], %s1676
        %s1678 = sand.u32 %s141, 1
        %s1679 = smul.addr %s1678, 128
        %s1680 = scalar_lea.vmem [#allocation10], %s1679
        // Predicated region
        $region53: #{tpu_custom_call.1} parent=39 // pred_check
          %p1681 = pneg %p151
        $region54: #{tpu_custom_call.1} parent=39 // pred_check_branch
          %1683 = sbr.rel (%p1681) target = $region56
        $region55: #{tpu_custom_call.1} parent=39 // pred_region
          %s1684 = smul.u32 8, %s23
          %s1686 = ssub.s32 2048, 2048
          %1687 = vsyncadd %s1677, %s1686
          %s1688 = smul.addr %s1684, 2
          %s1689 = smul.addr %s1688, 128
          %s1690 = scalar_lea.hbm %s5, %s1689
          %s1691 = sshll.u32 %s1680, 4
          %s1692 = int_to_ptr.vmem [resolvable:$true] %s1691
          %1697 = dma.vmem_to_hbm [thread:$0]  %s1692, 2048, %s1690, %s1677, 128, 128, 8
        $region56: #{tpu_custom_call.1} parent=39 // pred_fallthru
          _
      $region40: #{tpu_custom_call.1} parent=5 // pred_fallthru
        _
      %p1698 = scmp.le.s32.totalorder 2, %s18
      // Predicated region
      $region57: #{tpu_custom_call.1} parent=5 // pred_check
        %p1699 = pneg %p1698
      $region58: #{tpu_custom_call.1} parent=5 // pred_check_branch
        %1701 = sbr.rel (%p1699) target = $region60
      $region59: #{tpu_custom_call.1} parent=5 // pred_region
        %s1702 = ssub.s32 %s18, 2
        // Predicated region
        $region61: #{tpu_custom_call.1} parent=59 // pred_check
          %p1703 = pneg %p157
        $region62: #{tpu_custom_call.1} parent=59 // pred_check_branch
          %1705 = sbr.rel (%p1703) target = $region64
        $region63: #{tpu_custom_call.1} parent=59 // pred_region
          %s1706 = sand.u32 %s142, 1
          %s1707 = scalar_lea.sflag [#allocation6], %s1706
          %s1708 = sand.u32 %s142, 1
          %s1709 = smul.addr %s1708, 128
          %s1710 = scalar_lea.vmem [#allocation10], %s1709
          %1711 = dma.done %s1707, 2048
        $region64: #{tpu_custom_call.1} parent=59 // pred_fallthru
          _
      $region60: #{tpu_custom_call.1} parent=5 // pred_fallthru
        _
    $region6: #{tpu_custom_call.1} parent=1 // loop_footer
      %s22 = sadd.s32 1, %s18
    $region7: #{tpu_custom_call.1} parent=1 // loop_footer_branch
      %17 = sbr.rel target = $region3
    $region8: #{tpu_custom_call.1} parent=1 // loop_exit
      _
    %1712 = vsyncpa [#allocation5], 1
    %s1713 = scalar_lea.sflag [#allocation5], 1
    %1714 = vsyncpa %s1713, 1
    %1715 = vsyncpa [#allocation8], 1
    %1716 = vsyncpa [#allocation6], 1
    %s1717 = scalar_lea.sflag [#allocation6], 1
    %1718 = vsyncpa %s1717, 1

</llo_original>
